<compile_context>
chip_gen: v7x
topology: tpu7x:2x2x1
jax: 0.10.0
libtpu: 0.0.40
codegen_flags: <defaults>
</compile_context>

<pallas_src>
import functools

import jax
import jax.numpy as jnp
from jax.experimental import pallas as pl
from jax.experimental.pallas import tpu as pltpu

POINTS_SIZE = 100
CLASSIFICATION_LIST = [1]
FEAT_DIM = 1792  # mobilenet_v2(width_mult=1.4) final channel count

CORNER_OUT = 8
BORDER_OUT = (POINTS_SIZE - 4) * 2                              # 192
CLS_OUT = sum(CLASSIFICATION_LIST) + len(CLASSIFICATION_LIST)   # 2
TOTAL_OUT = CORNER_OUT + BORDER_OUT + CLS_OUT                   # 202
PAD_OUT = 256                                                   # lane-aligned pad
MAX_BT = 8                                                      # batch rows / step


def ldr_head_kernel(x_ref, w_ref, b_ref, o_ref, *, inv_hw):
    # x_ref: (Bt, HW, C)   bf16 NHWC-flat feature tile (C lane-dense)
    # w_ref: (C, PAD_OUT)  bf16 fused [corner|border|cls] weight, VMEM-resident
    # b_ref: (1, PAD_OUT)  f32 fused bias
    # o_ref: (Bt, PAD_OUT) f32 fused head output
    x = x_ref[...].astype(jnp.float32)          # upcast before reduce (v5e-safe)
    pooled = jnp.sum(x, axis=1) * inv_hw        # GlobalAvgPool2D -> (Bt, C)
    o_ref[...] = (
        jnp.dot(pooled.astype(jnp.bfloat16), w_ref[...],
                preferred_element_type=jnp.float32)
        + b_ref[...])


def ldrnet_head(feat_nhwc, w_fused, b_fused):
    B, H, W, C = feat_nhwc.shape
    hw = H * W
    assert C == FEAT_DIM, (C, FEAT_DIM)

    # Free reshape (no transpose, no extra cast pass): (B, HW, C), C on lanes.
    x = feat_nhwc.reshape(B, hw, C)

    # Batch tile: whole batch if small, else 8 rows/step (pad batch to x8).
    if B <= MAX_BT:
        bt, bp = B, B
    else:
        bt = MAX_BT
        bp = pl.cdiv(B, bt) * bt
        x = jnp.pad(x, ((0, bp - B), (0, 0), (0, 0)))

    kernel = functools.partial(ldr_head_kernel, inv_hw=1.0 / hw)
    out = pl.pallas_call(
        kernel,
        out_shape=jax.ShapeDtypeStruct((bp, PAD_OUT), jnp.float32),
        grid_spec=pltpu.PrefetchScalarGridSpec(
            num_scalar_prefetch=0,
            grid=(bp // bt,),
            in_specs=[
                pl.BlockSpec((bt, hw, C), lambda b: (b, 0, 0)),
                pl.BlockSpec((C, PAD_OUT), lambda b: (0, 0)),   # resident weight
                pl.BlockSpec((1, PAD_OUT), lambda b: (0, 0)),   # resident bias
            ],
            out_specs=pl.BlockSpec((bt, PAD_OUT), lambda b: (b, 0)),
        ),
        compiler_params=pltpu.CompilerParams(
            dimension_semantics=("parallel",)),   # batch tiles across TCs (v7x)
    )(x, w_fused, b_fused)

    out = out[:B]
    corner = out[:, :CORNER_OUT]
    border = out[:, CORNER_OUT:CORNER_OUT + BORDER_OUT]
    cls = out[:, CORNER_OUT + BORDER_OUT:TOTAL_OUT]
    return corner, border, cls


def backbone_standin(img_nchw, conv_w, conv_b):
    # TODO(synk): torchvision MobileNetV2(width_mult=1.4) backbone is not
    # reproduced here; a deterministic strided conv + ReLU6 stand-in produces
    # the same 1792-channel feature-map interface.  The internal layout is
    # chosen lane-dense NHWC and the bf16 cast happens in the conv epilogue
    # (GlobalAvgPool is layout-invariant, so module semantics are unchanged).
    y = jax.lax.conv_general_dilated(
        img_nchw, conv_w, window_strides=(16, 16), padding="VALID",
        dimension_numbers=("NCHW", "OIHW", "NHWC"))
    y = y + conv_b[None, None, None, :]
    y = jnp.clip(y, 0.0, 6.0)
    return y.astype(jnp.bfloat16)


def init_params(key):
    ks = jax.random.split(key, 8)
    # stand-in backbone conv: 3 -> 1792, 16x16 kernel, stride 16
    conv_w = jax.random.normal(ks[0], (FEAT_DIM, 3, 16, 16), jnp.float32) * 0.02
    conv_b = jax.random.normal(ks[1], (FEAT_DIM,), jnp.float32) * 0.02
    # linear heads (deterministic synthetic init; shapes from LDRNet.__init__)
    w_corner = jax.random.normal(ks[2], (FEAT_DIM, CORNER_OUT), jnp.float32) * 0.02
    b_corner = jax.random.normal(ks[3], (CORNER_OUT,), jnp.float32) * 0.02
    w_border = jax.random.normal(ks[4], (FEAT_DIM, BORDER_OUT), jnp.float32) * 0.02
    b_border = jax.random.normal(ks[5], (BORDER_OUT,), jnp.float32) * 0.02
    w_cls = jax.random.normal(ks[6], (FEAT_DIM, CLS_OUT), jnp.float32) * 0.02
    b_cls = jax.random.normal(ks[7], (CLS_OUT,), jnp.float32) * 0.02
    # fuse heads along the output dim, zero-pad to PAD_OUT lanes, store bf16
    w_fused = jnp.zeros((FEAT_DIM, PAD_OUT), jnp.float32)
    w_fused = w_fused.at[:, :CORNER_OUT].set(w_corner)
    w_fused = w_fused.at[:, CORNER_OUT:CORNER_OUT + BORDER_OUT].set(w_border)
    w_fused = w_fused.at[:, CORNER_OUT + BORDER_OUT:TOTAL_OUT].set(w_cls)
    w_fused = w_fused.astype(jnp.bfloat16)
    b_fused = jnp.zeros((1, PAD_OUT), jnp.float32)
    b_fused = b_fused.at[0, :CORNER_OUT].set(b_corner)
    b_fused = b_fused.at[0, CORNER_OUT:CORNER_OUT + BORDER_OUT].set(b_border)
    b_fused = b_fused.at[0, CORNER_OUT + BORDER_OUT:TOTAL_OUT].set(b_cls)
    return conv_w, conv_b, w_fused, b_fused


def ldrnet_forward(img_nchw, params):
    conv_w, conv_b, w_fused, b_fused = params
    feat = backbone_standin(img_nchw, conv_w, conv_b)   # (B, H/16, W/16, 1792) bf16
    return ldrnet_head(feat, w_fused, b_fused)


if __name__ == "__main__":
    key = jax.random.PRNGKey(0)
    k_img, k_param = jax.random.split(key)
    # small synthetic image batch (NCHW, like the PyTorch module's input)
    img = jax.random.normal(k_img, (2, 3, 64, 64), jnp.float32)
    params = init_params(k_param)

    corner, border, cls = jax.jit(ldrnet_forward)(img, params)
    jax.block_until_ready((corner, border, cls))

    assert corner.shape == (2, CORNER_OUT)
    assert border.shape == (2, BORDER_OUT)
    assert cls.shape == (2, CLS_OUT)

    # correctness check against a plain-JAX reference of the head using the
    # same bf16 feature / bf16 weight quantization as the kernel path
    feat = backbone_standin(img, params[0], params[1])
    B = feat.shape[0]
    pooled = jnp.mean(feat.astype(jnp.float32).reshape(B, -1, FEAT_DIM), axis=1)
    ref = (jnp.dot(pooled.astype(jnp.bfloat16), params[2],
                   preferred_element_type=jnp.float32) + params[3])
    fused = jnp.concatenate([corner, border, cls], axis=1)
    assert jnp.allclose(fused, ref[:, :TOTAL_OUT], atol=2e-3, rtol=2e-3)

    print("KERNEL_OK")
</pallas_src>

<mosaic_0001>
module attributes {stable_mosaic.version = 11 : i64} {
  func.func @ldr_head_kernel(%arg0: i32, %arg1: memref<2x16x1792xbf16, #tpu.memory_space<vmem>>, %arg2: memref<1792x256xbf16, #tpu.memory_space<vmem>>, %arg3: memref<1x256xf32, #tpu.memory_space<vmem>>, %arg4: memref<2x256xf32, #tpu.memory_space<vmem>>) attributes {dimension_semantics = [#tpu.dimension_semantics<parallel>], iteration_bounds = array<i64: 1>, scalar_prefetch = 0 : i64, scratch_operands = 0 : i64, tpu.core_type = #tpu.core_type<tc>, window_params = [{transform_indices = @transform_0, window_bounds = array<i64: 2, 16, 1792>}, {pipeline_mode = #tpu.pipeline_mode<synchronous>, transform_indices = @transform_1, window_bounds = array<i64: 1792, 256>}, {pipeline_mode = #tpu.pipeline_mode<synchronous>, transform_indices = @transform_2, window_bounds = array<i64: 1, 256>}, {transform_indices = @transform_3, window_bounds = array<i64: 2, 256>}]} {
    %c0 = arith.constant 0 : index
    %c0_0 = arith.constant 0 : index
    %c0_1 = arith.constant 0 : index
    %0 = vector.load %arg1[%c0, %c0_0, %c0_1] : memref<2x16x1792xbf16, #tpu.memory_space<vmem>>, vector<2x16x1792xbf16>
    %1 = arith.extf %0 : vector<2x16x1792xbf16> to vector<2x16x1792xf32>
    %cst = arith.constant dense<0.000000e+00> : vector<2x1792xf32>
    %2 = vector.multi_reduction <add>, %1, %cst [1] : vector<2x16x1792xf32> to vector<2x1792xf32>
    %cst_2 = arith.constant 6.250000e-02 : f32
    %3 = vector.broadcast %cst_2 : f32 to vector<2x1792xf32>
    %4 = arith.mulf %2, %3 : vector<2x1792xf32>
    %5 = arith.truncf %4 : vector<2x1792xf32> to vector<2x1792xbf16>
    %c0_3 = arith.constant 0 : index
    %c0_4 = arith.constant 0 : index
    %6 = vector.load %arg2[%c0_3, %c0_4] : memref<1792x256xbf16, #tpu.memory_space<vmem>>, vector<1792x256xbf16>
    %cst_5 = arith.constant dense<0.000000e+00> : vector<2x256xf32>
    %7 = tpu.matmul %5, %6, %cst_5 {dimension_numbers = #tpu.dot_dimension_numbers<[1], [0], [0], [1], [0, 0, 1, 1], [], []>} : vector<2x1792xbf16>, vector<1792x256xbf16>, vector<2x256xf32> -> vector<2x256xf32>
    %c0_6 = arith.constant 0 : index
    %c0_7 = arith.constant 0 : index
    %8 = vector.load %arg3[%c0_6, %c0_7] : memref<1x256xf32, #tpu.memory_space<vmem>>, vector<1x256xf32>
    %9 = vector.broadcast %8 : vector<1x256xf32> to vector<2x256xf32>
    %10 = arith.addf %7, %9 : vector<2x256xf32>
    %c0_8 = arith.constant 0 : index
    %c0_9 = arith.constant 0 : index
    %11 = vector.load %arg4[%c0_8, %c0_9] : memref<2x256xf32, #tpu.memory_space<vmem>>, vector<2x256xf32>
    tpu.vector_store %arg4[%c0_8, %c0_9], %10 {strides = array<i32>} : memref<2x256xf32, #tpu.memory_space<vmem>>, vector<2x256xf32>,
    return
  }
  func.func @transform_0(%arg0: i32) -> (i32, i32, i32) {
    %c0_i32 = arith.constant 0 : i32
    %c0_i32_0 = arith.constant 0 : i32
    %c0_i32_1 = arith.constant 0 : i32
    return %arg0, %c0_i32, %c0_i32_0 : i32, i32, i32
  }
  func.func @transform_1(%arg0: i32) -> (i32, i32) {
    %c0_i32 = arith.constant 0 : i32
    %c0_i32_0 = arith.constant 0 : i32
    %c0_i32_1 = arith.constant 0 : i32
    return %c0_i32, %c0_i32_0 : i32, i32
  }
  func.func @transform_2(%arg0: i32) -> (i32, i32) {
    %c0_i32 = arith.constant 0 : i32
    %c0_i32_0 = arith.constant 0 : i32
    %c0_i32_1 = arith.constant 0 : i32
    return %c0_i32, %c0_i32_0 : i32, i32
  }
  func.func @transform_3(%arg0: i32) -> (i32, i32) {
    %c0_i32 = arith.constant 0 : i32
    %c0_i32_0 = arith.constant 0 : i32
    return %arg0, %c0_i32 : i32, i32
  }
}

</mosaic_0001>

<llo_original>
// kernel: ldrnet_forward.1
$region0: #{ldrnet_forward.1}
  #allocation0 [shape = 'u32[]', space=smem, size = 0x4, offset = 0x4, fixed_abs, tag = 'smem constant byte address 0x4 - core index']
  #allocation1 [shape = 'u32[144,128]{1,0:T(1,128)}', space=vmem, size = 0x12000, scoped, tag = 'internal scratch']
  %s0 = inlined_call_operand.vmem [shape: bf16[2,16,1792], index: 0, kind: input, shape index: {}]
  %s1 = inlined_call_operand.vmem [shape: bf16[1792,256], index: 1, kind: input, shape index: {}]
  %s2 = inlined_call_operand.vmem [shape: f32[1,256], index: 2, kind: input, shape index: {}]
  %s3 = inlined_call_operand.vmem [shape: f32[2,256], index: 3, kind: output, shape index: {}]
  %s4 = sld [smem:[#allocation0]]
  $region22: #{ldrnet_forward.1} parent=0
    _
  %s6 = ssub.s32 1, %s4
  %s7 = scalar_select 0, %s6, %s4
  // Predicated region
  $region2: #{ldrnet_forward.1} parent=0 // pred_check
    _
  $region3: #{ldrnet_forward.1} parent=0 // pred_check_branch
    %9 = sbr.rel (0) target = $region5
  $region4: #{ldrnet_forward.1} parent=0 // pred_region
    _
  $region5: #{ldrnet_forward.1} parent=0 // pred_fallthru
    _
  // Predicated region
  $region6: #{ldrnet_forward.1} parent=0 // pred_check
    _
  $region7: #{ldrnet_forward.1} parent=0 // pred_check_branch
    %11 = sbr.rel (0) target = $region9
  $region8: #{ldrnet_forward.1} parent=0 // pred_region
    _
  $region9: #{ldrnet_forward.1} parent=0 // pred_fallthru
    _
  // Predicated region
  $region10: #{ldrnet_forward.1} parent=0 // pred_check
    _
  $region11: #{ldrnet_forward.1} parent=0 // pred_check_branch
    %13 = sbr.rel (0) target = $region13
  $region12: #{ldrnet_forward.1} parent=0 // pred_region
    _
  $region13: #{ldrnet_forward.1} parent=0 // pred_fallthru
    _
  %v14 = vld [vmem:[%s0] sm:$0xff]
  %v15 = vld [vmem:[%s0 + $0x8] sm:$0xff]
  %v16 = vld [vmem:[%s0 + $0x10] sm:$0xff]
  %v17 = vld [vmem:[%s0 + $0x18] sm:$0xff]
  %v18 = vld [vmem:[%s0 + $0x20] sm:$0xff]
  %v19 = vld [vmem:[%s0 + $0x28] sm:$0xff]
  %v20 = vld [vmem:[%s0 + $0x30] sm:$0xff]
  %v21 = vld [vmem:[%s0 + $0x38] sm:$0xff]
  %v22 = vld [vmem:[%s0 + $0x40] sm:$0xff]
  %v23 = vld [vmem:[%s0 + $0x48] sm:$0xff]
  %v24 = vld [vmem:[%s0 + $0x50] sm:$0xff]
  %v25 = vld [vmem:[%s0 + $0x58] sm:$0xff]
  %v26 = vld [vmem:[%s0 + $0x60] sm:$0xff]
  %v27 = vld [vmem:[%s0 + $0x68] sm:$0xff]
  %v28 = vld [vmem:[%s0 + $0x70] sm:$0xff]
  %v29 = vld [vmem:[%s0 + $0x78] sm:$0xff]
  %v30 = vld [vmem:[%s0 + $0x80] sm:$0xff]
  %v31 = vld [vmem:[%s0 + $0x88] sm:$0xff]
  %v32 = vld [vmem:[%s0 + $0x90] sm:$0xff]
  %v33 = vld [vmem:[%s0 + $0x98] sm:$0xff]
  %v34 = vld [vmem:[%s0 + $0xa0] sm:$0xff]
  %v35 = vld [vmem:[%s0 + $0xa8] sm:$0xff]
  %v36 = vld [vmem:[%s0 + $0xb0] sm:$0xff]
  %v37 = vld [vmem:[%s0 + $0xb8] sm:$0xff]
  %v38 = vld [vmem:[%s0 + $0xc0] sm:$0xff]
  %v39 = vld [vmem:[%s0 + $0xc8] sm:$0xff]
  %v40 = vld [vmem:[%s0 + $0xd0] sm:$0xff]
  %v41 = vld [vmem:[%s0 + $0xd8] sm:$0xff]
  %v42 = vunpack.c.l.bf16 %v14
  %v43 = vunpack.c.h.bf16 %v14
  %v44 = vunpack.c.l.bf16 %v15
  %v45 = vunpack.c.h.bf16 %v15
  %v46 = vunpack.c.l.bf16 %v16
  %v47 = vunpack.c.h.bf16 %v16
  %v48 = vunpack.c.l.bf16 %v17
  %v49 = vunpack.c.h.bf16 %v17
  %v50 = vunpack.c.l.bf16 %v18
  %v51 = vunpack.c.h.bf16 %v18
  %v52 = vunpack.c.l.bf16 %v19
  %v53 = vunpack.c.h.bf16 %v19
  %v54 = vunpack.c.l.bf16 %v20
  %v55 = vunpack.c.h.bf16 %v20
  %v56 = vunpack.c.l.bf16 %v21
  %v57 = vunpack.c.h.bf16 %v21
  %v58 = vunpack.c.l.bf16 %v22
  %v59 = vunpack.c.h.bf16 %v22
  %v60 = vunpack.c.l.bf16 %v23
  %v61 = vunpack.c.h.bf16 %v23
  %v62 = vunpack.c.l.bf16 %v24
  %v63 = vunpack.c.h.bf16 %v24
  %v64 = vunpack.c.l.bf16 %v25
  %v65 = vunpack.c.h.bf16 %v25
  %v66 = vunpack.c.l.bf16 %v26
  %v67 = vunpack.c.h.bf16 %v26
  %v68 = vunpack.c.l.bf16 %v27
  %v69 = vunpack.c.h.bf16 %v27
  %v70 = vunpack.c.l.bf16 %v28
  %v71 = vunpack.c.h.bf16 %v28
  %v72 = vunpack.c.l.bf16 %v29
  %v73 = vunpack.c.h.bf16 %v29
  %v74 = vunpack.c.l.bf16 %v30
  %v75 = vunpack.c.h.bf16 %v30
  %v76 = vunpack.c.l.bf16 %v31
  %v77 = vunpack.c.h.bf16 %v31
  %v78 = vunpack.c.l.bf16 %v32
  %v79 = vunpack.c.h.bf16 %v32
  %v80 = vunpack.c.l.bf16 %v33
  %v81 = vunpack.c.h.bf16 %v33
  %v82 = vunpack.c.l.bf16 %v34
  %v83 = vunpack.c.h.bf16 %v34
  %v84 = vunpack.c.l.bf16 %v35
  %v85 = vunpack.c.h.bf16 %v35
  %v86 = vunpack.c.l.bf16 %v36
  %v87 = vunpack.c.h.bf16 %v36
  %v88 = vunpack.c.l.bf16 %v37
  %v89 = vunpack.c.h.bf16 %v37
  %v90 = vunpack.c.l.bf16 %v38
  %v91 = vunpack.c.h.bf16 %v38
  %v92 = vunpack.c.l.bf16 %v39
  %v93 = vunpack.c.h.bf16 %v39
  %v94 = vunpack.c.l.bf16 %v40
  %v95 = vunpack.c.h.bf16 %v40
  %v96 = vunpack.c.l.bf16 %v41
  %v97 = vunpack.c.h.bf16 %v41
  %v98 = vadd.f32 %v42, %v56
  %v99 = vrot.slane %v98, 4
  %v100 = vadd.f32 %v98, %v99
  %v101 = vrot.slane %v100, 2
  %v102 = vadd.f32 %v100, %v101
  %v103 = vrot.slane %v102, 1
  %v104 = vadd.f32 %v102, %v103
  %v105 = vadd.f32 %v43, %v57
  %v106 = vrot.slane %v105, 4
  %v107 = vadd.f32 %v105, %v106
  %v108 = vrot.slane %v107, 2
  %v109 = vadd.f32 %v107, %v108
  %v110 = vrot.slane %v109, 1
  %v111 = vadd.f32 %v109, %v110
  %v112 = vadd.f32 %v44, %v58
  %v113 = vrot.slane %v112, 4
  %v114 = vadd.f32 %v112, %v113
  %v115 = vrot.slane %v114, 2
  %v116 = vadd.f32 %v114, %v115
  %v117 = vrot.slane %v116, 1
  %v118 = vadd.f32 %v116, %v117
  %v119 = vadd.f32 %v45, %v59
  %v120 = vrot.slane %v119, 4
  %v121 = vadd.f32 %v119, %v120
  %v122 = vrot.slane %v121, 2
  %v123 = vadd.f32 %v121, %v122
  %v124 = vrot.slane %v123, 1
  %v125 = vadd.f32 %v123, %v124
  %v126 = vadd.f32 %v46, %v60
  %v127 = vrot.slane %v126, 4
  %v128 = vadd.f32 %v126, %v127
  %v129 = vrot.slane %v128, 2
  %v130 = vadd.f32 %v128, %v129
  %v131 = vrot.slane %v130, 1
  %v132 = vadd.f32 %v130, %v131
  %v133 = vadd.f32 %v47, %v61
  %v134 = vrot.slane %v133, 4
  %v135 = vadd.f32 %v133, %v134
  %v136 = vrot.slane %v135, 2
  %v137 = vadd.f32 %v135, %v136
  %v138 = vrot.slane %v137, 1
  %v139 = vadd.f32 %v137, %v138
  %v140 = vadd.f32 %v48, %v62
  %v141 = vrot.slane %v140, 4
  %v142 = vadd.f32 %v140, %v141
  %v143 = vrot.slane %v142, 2
  %v144 = vadd.f32 %v142, %v143
  %v145 = vrot.slane %v144, 1
  %v146 = vadd.f32 %v144, %v145
  %v147 = vadd.f32 %v49, %v63
  %v148 = vrot.slane %v147, 4
  %v149 = vadd.f32 %v147, %v148
  %v150 = vrot.slane %v149, 2
  %v151 = vadd.f32 %v149, %v150
  %v152 = vrot.slane %v151, 1
  %v153 = vadd.f32 %v151, %v152
  %v154 = vadd.f32 %v50, %v64
  %v155 = vrot.slane %v154, 4
  %v156 = vadd.f32 %v154, %v155
  %v157 = vrot.slane %v156, 2
  %v158 = vadd.f32 %v156, %v157
  %v159 = vrot.slane %v158, 1
  %v160 = vadd.f32 %v158, %v159
  %v161 = vadd.f32 %v51, %v65
  %v162 = vrot.slane %v161, 4
  %v163 = vadd.f32 %v161, %v162
  %v164 = vrot.slane %v163, 2
  %v165 = vadd.f32 %v163, %v164
  %v166 = vrot.slane %v165, 1
  %v167 = vadd.f32 %v165, %v166
  %v168 = vadd.f32 %v52, %v66
  %v169 = vrot.slane %v168, 4
  %v170 = vadd.f32 %v168, %v169
  %v171 = vrot.slane %v170, 2
  %v172 = vadd.f32 %v170, %v171
  %v173 = vrot.slane %v172, 1
  %v174 = vadd.f32 %v172, %v173
  %v175 = vadd.f32 %v53, %v67
  %v176 = vrot.slane %v175, 4
  %v177 = vadd.f32 %v175, %v176
  %v178 = vrot.slane %v177, 2
  %v179 = vadd.f32 %v177, %v178
  %v180 = vrot.slane %v179, 1
  %v181 = vadd.f32 %v179, %v180
  %v182 = vadd.f32 %v54, %v68
  %v183 = vrot.slane %v182, 4
  %v184 = vadd.f32 %v182, %v183
  %v185 = vrot.slane %v184, 2
  %v186 = vadd.f32 %v184, %v185
  %v187 = vrot.slane %v186, 1
  %v188 = vadd.f32 %v186, %v187
  %v189 = vadd.f32 %v55, %v69
  %v190 = vrot.slane %v189, 4
  %v191 = vadd.f32 %v189, %v190
  %v192 = vrot.slane %v191, 2
  %v193 = vadd.f32 %v191, %v192
  %v194 = vrot.slane %v193, 1
  %v195 = vadd.f32 %v193, %v194
  %v196 = vadd.f32 %v70, %v84
  %v197 = vrot.slane %v196, 4
  %v198 = vadd.f32 %v196, %v197
  %v199 = vrot.slane %v198, 2
  %v200 = vadd.f32 %v198, %v199
  %v201 = vrot.slane %v200, 1
  %v202 = vadd.f32 %v200, %v201
  %v203 = vadd.f32 %v71, %v85
  %v204 = vrot.slane %v203, 4
  %v205 = vadd.f32 %v203, %v204
  %v206 = vrot.slane %v205, 2
  %v207 = vadd.f32 %v205, %v206
  %v208 = vrot.slane %v207, 1
  %v209 = vadd.f32 %v207, %v208
  %v210 = vadd.f32 %v72, %v86
  %v211 = vrot.slane %v210, 4
  %v212 = vadd.f32 %v210, %v211
  %v213 = vrot.slane %v212, 2
  %v214 = vadd.f32 %v212, %v213
  %v215 = vrot.slane %v214, 1
  %v216 = vadd.f32 %v214, %v215
  %v217 = vadd.f32 %v73, %v87
  %v218 = vrot.slane %v217, 4
  %v219 = vadd.f32 %v217, %v218
  %v220 = vrot.slane %v219, 2
  %v221 = vadd.f32 %v219, %v220
  %v222 = vrot.slane %v221, 1
  %v223 = vadd.f32 %v221, %v222
  %v224 = vadd.f32 %v74, %v88
  %v225 = vrot.slane %v224, 4
  %v226 = vadd.f32 %v224, %v225
  %v227 = vrot.slane %v226, 2
  %v228 = vadd.f32 %v226, %v227
  %v229 = vrot.slane %v228, 1
  %v230 = vadd.f32 %v228, %v229
  %v231 = vadd.f32 %v75, %v89
  %v232 = vrot.slane %v231, 4
  %v233 = vadd.f32 %v231, %v232
  %v234 = vrot.slane %v233, 2
  %v235 = vadd.f32 %v233, %v234
  %v236 = vrot.slane %v235, 1
  %v237 = vadd.f32 %v235, %v236
  %v238 = vadd.f32 %v76, %v90
  %v239 = vrot.slane %v238, 4
  %v240 = vadd.f32 %v238, %v239
  %v241 = vrot.slane %v240, 2
  %v242 = vadd.f32 %v240, %v241
  %v243 = vrot.slane %v242, 1
  %v244 = vadd.f32 %v242, %v243
  %v245 = vadd.f32 %v77, %v91
  %v246 = vrot.slane %v245, 4
  %v247 = vadd.f32 %v245, %v246
  %v248 = vrot.slane %v247, 2
  %v249 = vadd.f32 %v247, %v248
  %v250 = vrot.slane %v249, 1
  %v251 = vadd.f32 %v249, %v250
  %v252 = vadd.f32 %v78, %v92
  %v253 = vrot.slane %v252, 4
  %v254 = vadd.f32 %v252, %v253
  %v255 = vrot.slane %v254, 2
  %v256 = vadd.f32 %v254, %v255
  %v257 = vrot.slane %v256, 1
  %v258 = vadd.f32 %v256, %v257
  %v259 = vadd.f32 %v79, %v93
  %v260 = vrot.slane %v259, 4
  %v261 = vadd.f32 %v259, %v260
  %v262 = vrot.slane %v261, 2
  %v263 = vadd.f32 %v261, %v262
  %v264 = vrot.slane %v263, 1
  %v265 = vadd.f32 %v263, %v264
  %v266 = vadd.f32 %v80, %v94
  %v267 = vrot.slane %v266, 4
  %v268 = vadd.f32 %v266, %v267
  %v269 = vrot.slane %v268, 2
  %v270 = vadd.f32 %v268, %v269
  %v271 = vrot.slane %v270, 1
  %v272 = vadd.f32 %v270, %v271
  %v273 = vadd.f32 %v81, %v95
  %v274 = vrot.slane %v273, 4
  %v275 = vadd.f32 %v273, %v274
  %v276 = vrot.slane %v275, 2
  %v277 = vadd.f32 %v275, %v276
  %v278 = vrot.slane %v277, 1
  %v279 = vadd.f32 %v277, %v278
  %v280 = vadd.f32 %v82, %v96
  %v281 = vrot.slane %v280, 4
  %v282 = vadd.f32 %v280, %v281
  %v283 = vrot.slane %v282, 2
  %v284 = vadd.f32 %v282, %v283
  %v285 = vrot.slane %v284, 1
  %v286 = vadd.f32 %v284, %v285
  %v287 = vadd.f32 %v83, %v97
  %v288 = vrot.slane %v287, 4
  %v289 = vadd.f32 %v287, %v288
  %v290 = vrot.slane %v289, 2
  %v291 = vadd.f32 %v289, %v290
  %v292 = vrot.slane %v291, 1
  %v293 = vadd.f32 %v291, %v292
  %v294 = vmul.f32 %v104, 0.0625
  %v295 = vmul.f32 %v111, 0.0625
  %v296 = vmul.f32 %v118, 0.0625
  %v297 = vmul.f32 %v125, 0.0625
  %v298 = vmul.f32 %v132, 0.0625
  %v299 = vmul.f32 %v139, 0.0625
  %v300 = vmul.f32 %v146, 0.0625
  %v301 = vmul.f32 %v153, 0.0625
  %v302 = vmul.f32 %v160, 0.0625
  %v303 = vmul.f32 %v167, 0.0625
  %v304 = vmul.f32 %v174, 0.0625
  %v305 = vmul.f32 %v181, 0.0625
  %v306 = vmul.f32 %v188, 0.0625
  %v307 = vmul.f32 %v195, 0.0625
  %v308 = vmul.f32 %v202, 0.0625
  %v309 = vmul.f32 %v209, 0.0625
  %v310 = vmul.f32 %v216, 0.0625
  %v311 = vmul.f32 %v223, 0.0625
  %v312 = vmul.f32 %v230, 0.0625
  %v313 = vmul.f32 %v237, 0.0625
  %v314 = vmul.f32 %v244, 0.0625
  %v315 = vmul.f32 %v251, 0.0625
  %v316 = vmul.f32 %v258, 0.0625
  %v317 = vmul.f32 %v265, 0.0625
  %v318 = vmul.f32 %v272, 0.0625
  %v319 = vmul.f32 %v279, 0.0625
  %v320 = vmul.f32 %v286, 0.0625
  %v321 = vmul.f32 %v293, 0.0625
  %v322 = vpack.c.bf16 %v294, %v294
  %v323 = vpack.c.bf16 %v295, %v295
  %v324 = vpack.c.bf16 %v296, %v296
  %v325 = vpack.c.bf16 %v297, %v297
  %v326 = vpack.c.bf16 %v298, %v298
  %v327 = vpack.c.bf16 %v299, %v299
  %v328 = vpack.c.bf16 %v300, %v300
  %v329 = vpack.c.bf16 %v301, %v301
  %v330 = vpack.c.bf16 %v302, %v302
  %v331 = vpack.c.bf16 %v303, %v303
  %v332 = vpack.c.bf16 %v304, %v304
  %v333 = vpack.c.bf16 %v305, %v305
  %v334 = vpack.c.bf16 %v306, %v306
  %v335 = vpack.c.bf16 %v307, %v307
  %v336 = vpack.c.bf16 %v308, %v308
  %v337 = vpack.c.bf16 %v309, %v309
  %v338 = vpack.c.bf16 %v310, %v310
  %v339 = vpack.c.bf16 %v311, %v311
  %v340 = vpack.c.bf16 %v312, %v312
  %v341 = vpack.c.bf16 %v313, %v313
  %v342 = vpack.c.bf16 %v314, %v314
  %v343 = vpack.c.bf16 %v315, %v315
  %v344 = vpack.c.bf16 %v316, %v316
  %v345 = vpack.c.bf16 %v317, %v317
  %v346 = vpack.c.bf16 %v318, %v318
  %v347 = vpack.c.bf16 %v319, %v319
  %v348 = vpack.c.bf16 %v320, %v320
  %v349 = vpack.c.bf16 %v321, %v321
  %v350 = vld [vmem:[%s1] sm:$0xff]
  %v351 = vld [vmem:[%s1 + $0x8] sm:$0xff]
  %v352 = vld [vmem:[%s1 + $0x10] sm:$0xff]
  %v353 = vld [vmem:[%s1 + $0x18] sm:$0xff]
  %v354 = vld [vmem:[%s1 + $0x20] sm:$0xff]
  %v355 = vld [vmem:[%s1 + $0x28] sm:$0xff]
  %v356 = vld [vmem:[%s1 + $0x30] sm:$0xff]
  %v357 = vld [vmem:[%s1 + $0x38] sm:$0xff]
  %v358 = vld [vmem:[%s1 + $0x40] sm:$0xff]
  %v359 = vld [vmem:[%s1 + $0x48] sm:$0xff]
  %v360 = vld [vmem:[%s1 + $0x50] sm:$0xff]
  %v361 = vld [vmem:[%s1 + $0x58] sm:$0xff]
  %v362 = vld [vmem:[%s1 + $0x60] sm:$0xff]
  %v363 = vld [vmem:[%s1 + $0x68] sm:$0xff]
  %v364 = vld [vmem:[%s1 + $0x70] sm:$0xff]
  %v365 = vld [vmem:[%s1 + $0x78] sm:$0xff]
  %v366 = vld [vmem:[%s1 + $0x80] sm:$0xff]
  %v367 = vld [vmem:[%s1 + $0x88] sm:$0xff]
  %v368 = vld [vmem:[%s1 + $0x90] sm:$0xff]
  %v369 = vld [vmem:[%s1 + $0x98] sm:$0xff]
  %v370 = vld [vmem:[%s1 + $0xa0] sm:$0xff]
  %v371 = vld [vmem:[%s1 + $0xa8] sm:$0xff]
  %v372 = vld [vmem:[%s1 + $0xb0] sm:$0xff]
  %v373 = vld [vmem:[%s1 + $0xb8] sm:$0xff]
  %v374 = vld [vmem:[%s1 + $0xc0] sm:$0xff]
  %v375 = vld [vmem:[%s1 + $0xc8] sm:$0xff]
  %v376 = vld [vmem:[%s1 + $0xd0] sm:$0xff]
  %v377 = vld [vmem:[%s1 + $0xd8] sm:$0xff]
  %v378 = vld [vmem:[%s1 + $0xe0] sm:$0xff]
  %v379 = vld [vmem:[%s1 + $0xe8] sm:$0xff]
  %v380 = vld [vmem:[%s1 + $0xf0] sm:$0xff]
  %v381 = vld [vmem:[%s1 + $0xf8] sm:$0xff]
  %v382 = vld [vmem:[%s1 + $0x100] sm:$0xff]
  %v383 = vld [vmem:[%s1 + $0x108] sm:$0xff]
  %v384 = vld [vmem:[%s1 + $0x110] sm:$0xff]
  %v385 = vld [vmem:[%s1 + $0x118] sm:$0xff]
  %v386 = vld [vmem:[%s1 + $0x120] sm:$0xff]
  %v387 = vld [vmem:[%s1 + $0x128] sm:$0xff]
  %v388 = vld [vmem:[%s1 + $0x130] sm:$0xff]
  %v389 = vld [vmem:[%s1 + $0x138] sm:$0xff]
  %v390 = vld [vmem:[%s1 + $0x140] sm:$0xff]
  %v391 = vld [vmem:[%s1 + $0x148] sm:$0xff]
  %v392 = vld [vmem:[%s1 + $0x150] sm:$0xff]
  %v393 = vld [vmem:[%s1 + $0x158] sm:$0xff]
  %v394 = vld [vmem:[%s1 + $0x160] sm:$0xff]
  %v395 = vld [vmem:[%s1 + $0x168] sm:$0xff]
  %v396 = vld [vmem:[%s1 + $0x170] sm:$0xff]
  %v397 = vld [vmem:[%s1 + $0x178] sm:$0xff]
  %v398 = vld [vmem:[%s1 + $0x180] sm:$0xff]
  %v399 = vld [vmem:[%s1 + $0x188] sm:$0xff]
  %v400 = vld [vmem:[%s1 + $0x190] sm:$0xff]
  %v401 = vld [vmem:[%s1 + $0x198] sm:$0xff]
  %v402 = vld [vmem:[%s1 + $0x1a0] sm:$0xff]
  %v403 = vld [vmem:[%s1 + $0x1a8] sm:$0xff]
  %v404 = vld [vmem:[%s1 + $0x1b0] sm:$0xff]
  %v405 = vld [vmem:[%s1 + $0x1b8] sm:$0xff]
  %v406 = vld [vmem:[%s1 + $0x1c0] sm:$0xff]
  %v407 = vld [vmem:[%s1 + $0x1c8] sm:$0xff]
  %v408 = vld [vmem:[%s1 + $0x1d0] sm:$0xff]
  %v409 = vld [vmem:[%s1 + $0x1d8] sm:$0xff]
  %v410 = vld [vmem:[%s1 + $0x1e0] sm:$0xff]
  %v411 = vld [vmem:[%s1 + $0x1e8] sm:$0xff]
  %v412 = vld [vmem:[%s1 + $0x1f0] sm:$0xff]
  %v413 = vld [vmem:[%s1 + $0x1f8] sm:$0xff]
  %v414 = vld [vmem:[%s1 + $0x200] sm:$0xff]
  %v415 = vld [vmem:[%s1 + $0x208] sm:$0xff]
  %v416 = vld [vmem:[%s1 + $0x210] sm:$0xff]
  %v417 = vld [vmem:[%s1 + $0x218] sm:$0xff]
  %v418 = vld [vmem:[%s1 + $0x220] sm:$0xff]
  %v419 = vld [vmem:[%s1 + $0x228] sm:$0xff]
  %v420 = vld [vmem:[%s1 + $0x230] sm:$0xff]
  %v421 = vld [vmem:[%s1 + $0x238] sm:$0xff]
  %v422 = vld [vmem:[%s1 + $0x240] sm:$0xff]
  %v423 = vld [vmem:[%s1 + $0x248] sm:$0xff]
  %v424 = vld [vmem:[%s1 + $0x250] sm:$0xff]
  %v425 = vld [vmem:[%s1 + $0x258] sm:$0xff]
  %v426 = vld [vmem:[%s1 + $0x260] sm:$0xff]
  %v427 = vld [vmem:[%s1 + $0x268] sm:$0xff]
  %v428 = vld [vmem:[%s1 + $0x270] sm:$0xff]
  %v429 = vld [vmem:[%s1 + $0x278] sm:$0xff]
  %v430 = vld [vmem:[%s1 + $0x280] sm:$0xff]
  %v431 = vld [vmem:[%s1 + $0x288] sm:$0xff]
  %v432 = vld [vmem:[%s1 + $0x290] sm:$0xff]
  %v433 = vld [vmem:[%s1 + $0x298] sm:$0xff]
  %v434 = vld [vmem:[%s1 + $0x2a0] sm:$0xff]
  %v435 = vld [vmem:[%s1 + $0x2a8] sm:$0xff]
  %v436 = vld [vmem:[%s1 + $0x2b0] sm:$0xff]
  %v437 = vld [vmem:[%s1 + $0x2b8] sm:$0xff]
  %v438 = vld [vmem:[%s1 + $0x2c0] sm:$0xff]
  %v439 = vld [vmem:[%s1 + $0x2c8] sm:$0xff]
  %v440 = vld [vmem:[%s1 + $0x2d0] sm:$0xff]
  %v441 = vld [vmem:[%s1 + $0x2d8] sm:$0xff]
  %v442 = vld [vmem:[%s1 + $0x2e0] sm:$0xff]
  %v443 = vld [vmem:[%s1 + $0x2e8] sm:$0xff]
  %v444 = vld [vmem:[%s1 + $0x2f0] sm:$0xff]
  %v445 = vld [vmem:[%s1 + $0x2f8] sm:$0xff]
  %v446 = vld [vmem:[%s1 + $0x300] sm:$0xff]
  %v447 = vld [vmem:[%s1 + $0x308] sm:$0xff]
  %v448 = vld [vmem:[%s1 + $0x310] sm:$0xff]
  %v449 = vld [vmem:[%s1 + $0x318] sm:$0xff]
  %v450 = vld [vmem:[%s1 + $0x320] sm:$0xff]
  %v451 = vld [vmem:[%s1 + $0x328] sm:$0xff]
  %v452 = vld [vmem:[%s1 + $0x330] sm:$0xff]
  %v453 = vld [vmem:[%s1 + $0x338] sm:$0xff]
  %v454 = vld [vmem:[%s1 + $0x340] sm:$0xff]
  %v455 = vld [vmem:[%s1 + $0x348] sm:$0xff]
  %v456 = vld [vmem:[%s1 + $0x350] sm:$0xff]
  %v457 = vld [vmem:[%s1 + $0x358] sm:$0xff]
  %v458 = vld [vmem:[%s1 + $0x360] sm:$0xff]
  %v459 = vld [vmem:[%s1 + $0x368] sm:$0xff]
  %v460 = vld [vmem:[%s1 + $0x370] sm:$0xff]
  %v461 = vld [vmem:[%s1 + $0x378] sm:$0xff]
  %v462 = vld [vmem:[%s1 + $0x380] sm:$0xff]
  %v463 = vld [vmem:[%s1 + $0x388] sm:$0xff]
  %v464 = vld [vmem:[%s1 + $0x390] sm:$0xff]
  %v465 = vld [vmem:[%s1 + $0x398] sm:$0xff]
  %v466 = vld [vmem:[%s1 + $0x3a0] sm:$0xff]
  %v467 = vld [vmem:[%s1 + $0x3a8] sm:$0xff]
  %v468 = vld [vmem:[%s1 + $0x3b0] sm:$0xff]
  %v469 = vld [vmem:[%s1 + $0x3b8] sm:$0xff]
  %v470 = vld [vmem:[%s1 + $0x3c0] sm:$0xff]
  %v471 = vld [vmem:[%s1 + $0x3c8] sm:$0xff]
  %v472 = vld [vmem:[%s1 + $0x3d0] sm:$0xff]
  %v473 = vld [vmem:[%s1 + $0x3d8] sm:$0xff]
  %v474 = vld [vmem:[%s1 + $0x3e0] sm:$0xff]
  %v475 = vld [vmem:[%s1 + $0x3e8] sm:$0xff]
  %v476 = vld [vmem:[%s1 + $0x3f0] sm:$0xff]
  %v477 = vld [vmem:[%s1 + $0x3f8] sm:$0xff]
  %v478 = vld [vmem:[%s1 + $0x400] sm:$0xff]
  %v479 = vld [vmem:[%s1 + $0x408] sm:$0xff]
  %v480 = vld [vmem:[%s1 + $0x410] sm:$0xff]
  %v481 = vld [vmem:[%s1 + $0x418] sm:$0xff]
  %v482 = vld [vmem:[%s1 + $0x420] sm:$0xff]
  %v483 = vld [vmem:[%s1 + $0x428] sm:$0xff]
  %v484 = vld [vmem:[%s1 + $0x430] sm:$0xff]
  %v485 = vld [vmem:[%s1 + $0x438] sm:$0xff]
  %v486 = vld [vmem:[%s1 + $0x440] sm:$0xff]
  %v487 = vld [vmem:[%s1 + $0x448] sm:$0xff]
  %v488 = vld [vmem:[%s1 + $0x450] sm:$0xff]
  %v489 = vld [vmem:[%s1 + $0x458] sm:$0xff]
  %v490 = vld [vmem:[%s1 + $0x460] sm:$0xff]
  %v491 = vld [vmem:[%s1 + $0x468] sm:$0xff]
  %v492 = vld [vmem:[%s1 + $0x470] sm:$0xff]
  %v493 = vld [vmem:[%s1 + $0x478] sm:$0xff]
  %v494 = vld [vmem:[%s1 + $0x480] sm:$0xff]
  %v495 = vld [vmem:[%s1 + $0x488] sm:$0xff]
  %v496 = vld [vmem:[%s1 + $0x490] sm:$0xff]
  %v497 = vld [vmem:[%s1 + $0x498] sm:$0xff]
  %v498 = vld [vmem:[%s1 + $0x4a0] sm:$0xff]
  %v499 = vld [vmem:[%s1 + $0x4a8] sm:$0xff]
  %v500 = vld [vmem:[%s1 + $0x4b0] sm:$0xff]
  %v501 = vld [vmem:[%s1 + $0x4b8] sm:$0xff]
  %v502 = vld [vmem:[%s1 + $0x4c0] sm:$0xff]
  %v503 = vld [vmem:[%s1 + $0x4c8] sm:$0xff]
  %v504 = vld [vmem:[%s1 + $0x4d0] sm:$0xff]
  %v505 = vld [vmem:[%s1 + $0x4d8] sm:$0xff]
  %v506 = vld [vmem:[%s1 + $0x4e0] sm:$0xff]
  %v507 = vld [vmem:[%s1 + $0x4e8] sm:$0xff]
  %v508 = vld [vmem:[%s1 + $0x4f0] sm:$0xff]
  %v509 = vld [vmem:[%s1 + $0x4f8] sm:$0xff]
  %v510 = vld [vmem:[%s1 + $0x500] sm:$0xff]
  %v511 = vld [vmem:[%s1 + $0x508] sm:$0xff]
  %v512 = vld [vmem:[%s1 + $0x510] sm:$0xff]
  %v513 = vld [vmem:[%s1 + $0x518] sm:$0xff]
  %v514 = vld [vmem:[%s1 + $0x520] sm:$0xff]
  %v515 = vld [vmem:[%s1 + $0x528] sm:$0xff]
  %v516 = vld [vmem:[%s1 + $0x530] sm:$0xff]
  %v517 = vld [vmem:[%s1 + $0x538] sm:$0xff]
  %v518 = vld [vmem:[%s1 + $0x540] sm:$0xff]
  %v519 = vld [vmem:[%s1 + $0x548] sm:$0xff]
  %v520 = vld [vmem:[%s1 + $0x550] sm:$0xff]
  %v521 = vld [vmem:[%s1 + $0x558] sm:$0xff]
  %v522 = vld [vmem:[%s1 + $0x560] sm:$0xff]
  %v523 = vld [vmem:[%s1 + $0x568] sm:$0xff]
  %v524 = vld [vmem:[%s1 + $0x570] sm:$0xff]
  %v525 = vld [vmem:[%s1 + $0x578] sm:$0xff]
  %v526 = vld [vmem:[%s1 + $0x580] sm:$0xff]
  %v527 = vld [vmem:[%s1 + $0x588] sm:$0xff]
  %v528 = vld [vmem:[%s1 + $0x590] sm:$0xff]
  %v529 = vld [vmem:[%s1 + $0x598] sm:$0xff]
  %v530 = vld [vmem:[%s1 + $0x5a0] sm:$0xff]
  %v531 = vld [vmem:[%s1 + $0x5a8] sm:$0xff]
  %v532 = vld [vmem:[%s1 + $0x5b0] sm:$0xff]
  %v533 = vld [vmem:[%s1 + $0x5b8] sm:$0xff]
  %v534 = vld [vmem:[%s1 + $0x5c0] sm:$0xff]
  %v535 = vld [vmem:[%s1 + $0x5c8] sm:$0xff]
  %v536 = vld [vmem:[%s1 + $0x5d0] sm:$0xff]
  %v537 = vld [vmem:[%s1 + $0x5d8] sm:$0xff]
  %v538 = vld [vmem:[%s1 + $0x5e0] sm:$0xff]
  %v539 = vld [vmem:[%s1 + $0x5e8] sm:$0xff]
  %v540 = vld [vmem:[%s1 + $0x5f0] sm:$0xff]
  %v541 = vld [vmem:[%s1 + $0x5f8] sm:$0xff]
  %v542 = vld [vmem:[%s1 + $0x600] sm:$0xff]
  %v543 = vld [vmem:[%s1 + $0x608] sm:$0xff]
  %v544 = vld [vmem:[%s1 + $0x610] sm:$0xff]
  %v545 = vld [vmem:[%s1 + $0x618] sm:$0xff]
  %v546 = vld [vmem:[%s1 + $0x620] sm:$0xff]
  %v547 = vld [vmem:[%s1 + $0x628] sm:$0xff]
  %v548 = vld [vmem:[%s1 + $0x630] sm:$0xff]
  %v549 = vld [vmem:[%s1 + $0x638] sm:$0xff]
  %v550 = vld [vmem:[%s1 + $0x640] sm:$0xff]
  %v551 = vld [vmem:[%s1 + $0x648] sm:$0xff]
  %v552 = vld [vmem:[%s1 + $0x650] sm:$0xff]
  %v553 = vld [vmem:[%s1 + $0x658] sm:$0xff]
  %v554 = vld [vmem:[%s1 + $0x660] sm:$0xff]
  %v555 = vld [vmem:[%s1 + $0x668] sm:$0xff]
  %v556 = vld [vmem:[%s1 + $0x670] sm:$0xff]
  %v557 = vld [vmem:[%s1 + $0x678] sm:$0xff]
  %v558 = vld [vmem:[%s1 + $0x680] sm:$0xff]
  %v559 = vld [vmem:[%s1 + $0x688] sm:$0xff]
  %v560 = vld [vmem:[%s1 + $0x690] sm:$0xff]
  %v561 = vld [vmem:[%s1 + $0x698] sm:$0xff]
  %v562 = vld [vmem:[%s1 + $0x6a0] sm:$0xff]
  %v563 = vld [vmem:[%s1 + $0x6a8] sm:$0xff]
  %v564 = vld [vmem:[%s1 + $0x6b0] sm:$0xff]
  %v565 = vld [vmem:[%s1 + $0x6b8] sm:$0xff]
  %v566 = vld [vmem:[%s1 + $0x6c0] sm:$0xff]
  %v567 = vld [vmem:[%s1 + $0x6c8] sm:$0xff]
  %v568 = vld [vmem:[%s1 + $0x6d0] sm:$0xff]
  %v569 = vld [vmem:[%s1 + $0x6d8] sm:$0xff]
  %v570 = vld [vmem:[%s1 + $0x6e0] sm:$0xff]
  %v571 = vld [vmem:[%s1 + $0x6e8] sm:$0xff]
  %v572 = vld [vmem:[%s1 + $0x6f0] sm:$0xff]
  %v573 = vld [vmem:[%s1 + $0x6f8] sm:$0xff]
  %v574 = vld [vmem:[%s2] sm:$0x3]
  %v576 = vlaneseq
  %v577 = vshrl.u32 %v576, 7
  %v578 = vsub.s32 0, %v577
  %v579 = vrot.slane %v574, %v578
  %v580 = vlaneseq
  %v581 = vshrl.u32 %v580, 7
  %v582 = vsub.s32 1, %v581
  %v583 = vrot.slane %v574, %v582
  %v614 = vunpack.c.l.b16 %v322
  %v615 = vunpack.c.l.b16 %v323
  %v616 = vunpack.c.l.b16 %v324
  %v617 = vunpack.c.l.b16 %v325
  %v618 = vunpack.c.l.b16 %v326
  %v619 = vunpack.c.l.b16 %v327
  %v620 = vunpack.c.l.b16 %v328
  %v621 = vunpack.c.l.b16 %v329
  %v622 = vunpack.c.l.b16 %v330
  %v623 = vunpack.c.l.b16 %v331
  %v624 = vunpack.c.l.b16 %v332
  %v625 = vunpack.c.l.b16 %v333
  %v626 = vunpack.c.l.b16 %v334
  %v627 = vunpack.c.l.b16 %v335
  %v628 = vunpack.c.l.b16 %v336
  %v629 = vunpack.c.l.b16 %v337
  %v630 = vunpack.c.l.b16 %v338
  %v631 = vunpack.c.l.b16 %v339
  %v632 = vunpack.c.l.b16 %v340
  %v633 = vunpack.c.l.b16 %v341
  %v634 = vunpack.c.l.b16 %v342
  %v635 = vunpack.c.l.b16 %v343
  %v636 = vunpack.c.l.b16 %v344
  %v637 = vunpack.c.l.b16 %v345
  %v638 = vunpack.c.l.b16 %v346
  %v639 = vunpack.c.l.b16 %v347
  %v640 = vunpack.c.l.b16 %v348
  %v641 = vunpack.c.l.b16 %v349
  %vm642 = vcmask 1041409
  %v643 = vsel %vm642, %v628, %v614
  %v644 = vsel %vm642, %v629, %v615
  %v645 = vsel %vm642, %v630, %v616
  %v646 = vsel %vm642, %v631, %v617
  %v647 = vsel %vm642, %v632, %v618
  %v648 = vsel %vm642, %v633, %v619
  %v649 = vsel %vm642, %v634, %v620
  %v650 = vsel %vm642, %v635, %v621
  %v651 = vsel %vm642, %v636, %v622
  %v652 = vsel %vm642, %v637, %v623
  %v653 = vsel %vm642, %v638, %v624
  %v654 = vsel %vm642, %v639, %v625
  %v655 = vsel %vm642, %v640, %v626
  %v656 = vsel %vm642, %v641, %v627
  %v657 = vpack.c.b16 %v643, %v643
  %v658 = vpack.c.b16 %v644, %v644
  %v659 = vpack.c.b16 %v645, %v645
  %v660 = vpack.c.b16 %v646, %v646
  %v661 = vpack.c.b16 %v647, %v647
  %v662 = vpack.c.b16 %v648, %v648
  %v663 = vpack.c.b16 %v649, %v649
  %v664 = vpack.c.b16 %v650, %v650
  %v665 = vpack.c.b16 %v651, %v651
  %v666 = vpack.c.b16 %v652, %v652
  %v667 = vpack.c.b16 %v653, %v653
  %v668 = vpack.c.b16 %v654, %v654
  %v669 = vpack.c.b16 %v655, %v655
  %v670 = vpack.c.b16 %v656, %v656
  %v909 = vunpack.c.l.b16 %v350
  %v910 = vunpack.c.h.b16 %v350
  %v911 = vunpack.c.l.b16 %v351
  %v912 = vunpack.c.h.b16 %v351
  %v913 = vunpack.c.l.b16 %v352
  %v914 = vunpack.c.h.b16 %v352
  %v915 = vunpack.c.l.b16 %v353
  %v916 = vunpack.c.h.b16 %v353
  %v917 = vunpack.c.l.b16 %v354
  %v918 = vunpack.c.h.b16 %v354
  %v919 = vunpack.c.l.b16 %v355
  %v920 = vunpack.c.h.b16 %v355
  %v921 = vunpack.c.l.b16 %v356
  %v922 = vunpack.c.h.b16 %v356
  %v923 = vunpack.c.l.b16 %v357
  %v924 = vunpack.c.h.b16 %v357
  %v925 = vunpack.c.l.b16 %v358
  %v926 = vunpack.c.h.b16 %v358
  %v927 = vunpack.c.l.b16 %v359
  %v928 = vunpack.c.h.b16 %v359
  %v929 = vunpack.c.l.b16 %v360
  %v930 = vunpack.c.h.b16 %v360
  %v931 = vunpack.c.l.b16 %v361
  %v932 = vunpack.c.h.b16 %v361
  %v933 = vunpack.c.l.b16 %v362
  %v934 = vunpack.c.h.b16 %v362
  %v935 = vunpack.c.l.b16 %v363
  %v936 = vunpack.c.h.b16 %v363
  %v937 = vunpack.c.l.b16 %v364
  %v938 = vunpack.c.h.b16 %v364
  %v939 = vunpack.c.l.b16 %v365
  %v940 = vunpack.c.h.b16 %v365
  %v941 = vunpack.c.l.b16 %v366
  %v942 = vunpack.c.h.b16 %v366
  %v943 = vunpack.c.l.b16 %v367
  %v944 = vunpack.c.h.b16 %v367
  %v945 = vunpack.c.l.b16 %v368
  %v946 = vunpack.c.h.b16 %v368
  %v947 = vunpack.c.l.b16 %v369
  %v948 = vunpack.c.h.b16 %v369
  %v949 = vunpack.c.l.b16 %v370
  %v950 = vunpack.c.h.b16 %v370
  %v951 = vunpack.c.l.b16 %v371
  %v952 = vunpack.c.h.b16 %v371
  %v953 = vunpack.c.l.b16 %v372
  %v954 = vunpack.c.h.b16 %v372
  %v955 = vunpack.c.l.b16 %v373
  %v956 = vunpack.c.h.b16 %v373
  %v957 = vunpack.c.l.b16 %v374
  %v958 = vunpack.c.h.b16 %v374
  %v959 = vunpack.c.l.b16 %v375
  %v960 = vunpack.c.h.b16 %v375
  %v961 = vunpack.c.l.b16 %v376
  %v962 = vunpack.c.h.b16 %v376
  %v963 = vunpack.c.l.b16 %v377
  %v964 = vunpack.c.h.b16 %v377
  %v965 = vunpack.c.l.b16 %v378
  %v966 = vunpack.c.h.b16 %v378
  %v967 = vunpack.c.l.b16 %v379
  %v968 = vunpack.c.h.b16 %v379
  %v969 = vunpack.c.l.b16 %v380
  %v970 = vunpack.c.h.b16 %v380
  %v971 = vunpack.c.l.b16 %v381
  %v972 = vunpack.c.h.b16 %v381
  %v973 = vunpack.c.l.b16 %v382
  %v974 = vunpack.c.h.b16 %v382
  %v975 = vunpack.c.l.b16 %v383
  %v976 = vunpack.c.h.b16 %v383
  %v977 = vunpack.c.l.b16 %v384
  %v978 = vunpack.c.h.b16 %v384
  %v979 = vunpack.c.l.b16 %v385
  %v980 = vunpack.c.h.b16 %v385
  %v981 = vunpack.c.l.b16 %v386
  %v982 = vunpack.c.h.b16 %v386
  %v983 = vunpack.c.l.b16 %v387
  %v984 = vunpack.c.h.b16 %v387
  %v985 = vunpack.c.l.b16 %v388
  %v986 = vunpack.c.h.b16 %v388
  %v987 = vunpack.c.l.b16 %v389
  %v988 = vunpack.c.h.b16 %v389
  %v989 = vunpack.c.l.b16 %v390
  %v990 = vunpack.c.h.b16 %v390
  %v991 = vunpack.c.l.b16 %v391
  %v992 = vunpack.c.h.b16 %v391
  %v993 = vunpack.c.l.b16 %v392
  %v994 = vunpack.c.h.b16 %v392
  %v995 = vunpack.c.l.b16 %v393
  %v996 = vunpack.c.h.b16 %v393
  %v997 = vunpack.c.l.b16 %v394
  %v998 = vunpack.c.h.b16 %v394
  %v999 = vunpack.c.l.b16 %v395
  %v1000 = vunpack.c.h.b16 %v395
  %v1001 = vunpack.c.l.b16 %v396
  %v1002 = vunpack.c.h.b16 %v396
  %v1003 = vunpack.c.l.b16 %v397
  %v1004 = vunpack.c.h.b16 %v397
  %v1005 = vunpack.c.l.b16 %v398
  %v1006 = vunpack.c.h.b16 %v398
  %v1007 = vunpack.c.l.b16 %v399
  %v1008 = vunpack.c.h.b16 %v399
  %v1009 = vunpack.c.l.b16 %v400
  %v1010 = vunpack.c.h.b16 %v400
  %v1011 = vunpack.c.l.b16 %v401
  %v1012 = vunpack.c.h.b16 %v401
  %v1013 = vunpack.c.l.b16 %v402
  %v1014 = vunpack.c.h.b16 %v402
  %v1015 = vunpack.c.l.b16 %v403
  %v1016 = vunpack.c.h.b16 %v403
  %v1017 = vunpack.c.l.b16 %v404
  %v1018 = vunpack.c.h.b16 %v404
  %v1019 = vunpack.c.l.b16 %v405
  %v1020 = vunpack.c.h.b16 %v405
  %v1021 = vunpack.c.l.b16 %v406
  %v1022 = vunpack.c.h.b16 %v406
  %v1023 = vunpack.c.l.b16 %v407
  %v1024 = vunpack.c.h.b16 %v407
  %v1025 = vunpack.c.l.b16 %v408
  %v1026 = vunpack.c.h.b16 %v408
  %v1027 = vunpack.c.l.b16 %v409
  %v1028 = vunpack.c.h.b16 %v409
  %v1029 = vunpack.c.l.b16 %v410
  %v1030 = vunpack.c.h.b16 %v410
  %v1031 = vunpack.c.l.b16 %v411
  %v1032 = vunpack.c.h.b16 %v411
  %v1033 = vunpack.c.l.b16 %v412
  %v1034 = vunpack.c.h.b16 %v412
  %v1035 = vunpack.c.l.b16 %v413
  %v1036 = vunpack.c.h.b16 %v413
  %v1037 = vunpack.c.l.b16 %v414
  %v1038 = vunpack.c.h.b16 %v414
  %v1039 = vunpack.c.l.b16 %v415
  %v1040 = vunpack.c.h.b16 %v415
  %v1041 = vunpack.c.l.b16 %v416
  %v1042 = vunpack.c.h.b16 %v416
  %v1043 = vunpack.c.l.b16 %v417
  %v1044 = vunpack.c.h.b16 %v417
  %v1045 = vunpack.c.l.b16 %v418
  %v1046 = vunpack.c.h.b16 %v418
  %v1047 = vunpack.c.l.b16 %v419
  %v1048 = vunpack.c.h.b16 %v419
  %v1049 = vunpack.c.l.b16 %v420
  %v1050 = vunpack.c.h.b16 %v420
  %v1051 = vunpack.c.l.b16 %v421
  %v1052 = vunpack.c.h.b16 %v421
  %v1053 = vunpack.c.l.b16 %v422
  %v1054 = vunpack.c.h.b16 %v422
  %v1055 = vunpack.c.l.b16 %v423
  %v1056 = vunpack.c.h.b16 %v423
  %v1057 = vunpack.c.l.b16 %v424
  %v1058 = vunpack.c.h.b16 %v424
  %v1059 = vunpack.c.l.b16 %v425
  %v1060 = vunpack.c.h.b16 %v425
  %v1061 = vunpack.c.l.b16 %v426
  %v1062 = vunpack.c.h.b16 %v426
  %v1063 = vunpack.c.l.b16 %v427
  %v1064 = vunpack.c.h.b16 %v427
  %v1065 = vunpack.c.l.b16 %v428
  %v1066 = vunpack.c.h.b16 %v428
  %v1067 = vunpack.c.l.b16 %v429
  %v1068 = vunpack.c.h.b16 %v429
  %v1069 = vunpack.c.l.b16 %v430
  %v1070 = vunpack.c.h.b16 %v430
  %v1071 = vunpack.c.l.b16 %v431
  %v1072 = vunpack.c.h.b16 %v431
  %v1073 = vunpack.c.l.b16 %v432
  %v1074 = vunpack.c.h.b16 %v432
  %v1075 = vunpack.c.l.b16 %v433
  %v1076 = vunpack.c.h.b16 %v433
  %v1077 = vunpack.c.l.b16 %v434
  %v1078 = vunpack.c.h.b16 %v434
  %v1079 = vunpack.c.l.b16 %v435
  %v1080 = vunpack.c.h.b16 %v435
  %v1081 = vunpack.c.l.b16 %v436
  %v1082 = vunpack.c.h.b16 %v436
  %v1083 = vunpack.c.l.b16 %v437
  %v1084 = vunpack.c.h.b16 %v437
  %v1085 = vunpack.c.l.b16 %v438
  %v1086 = vunpack.c.h.b16 %v438
  %v1087 = vunpack.c.l.b16 %v439
  %v1088 = vunpack.c.h.b16 %v439
  %v1089 = vunpack.c.l.b16 %v440
  %v1090 = vunpack.c.h.b16 %v440
  %v1091 = vunpack.c.l.b16 %v441
  %v1092 = vunpack.c.h.b16 %v441
  %v1093 = vunpack.c.l.b16 %v442
  %v1094 = vunpack.c.h.b16 %v442
  %v1095 = vunpack.c.l.b16 %v443
  %v1096 = vunpack.c.h.b16 %v443
  %v1097 = vunpack.c.l.b16 %v444
  %v1098 = vunpack.c.h.b16 %v444
  %v1099 = vunpack.c.l.b16 %v445
  %v1100 = vunpack.c.h.b16 %v445
  %v1101 = vunpack.c.l.b16 %v446
  %v1102 = vunpack.c.h.b16 %v446
  %v1103 = vunpack.c.l.b16 %v447
  %v1104 = vunpack.c.h.b16 %v447
  %v1105 = vunpack.c.l.b16 %v448
  %v1106 = vunpack.c.h.b16 %v448
  %v1107 = vunpack.c.l.b16 %v449
  %v1108 = vunpack.c.h.b16 %v449
  %v1109 = vunpack.c.l.b16 %v450
  %v1110 = vunpack.c.h.b16 %v450
  %v1111 = vunpack.c.l.b16 %v451
  %v1112 = vunpack.c.h.b16 %v451
  %v1113 = vunpack.c.l.b16 %v452
  %v1114 = vunpack.c.h.b16 %v452
  %v1115 = vunpack.c.l.b16 %v453
  %v1116 = vunpack.c.h.b16 %v453
  %v1117 = vunpack.c.l.b16 %v454
  %v1118 = vunpack.c.h.b16 %v454
  %v1119 = vunpack.c.l.b16 %v455
  %v1120 = vunpack.c.h.b16 %v455
  %v1121 = vunpack.c.l.b16 %v456
  %v1122 = vunpack.c.h.b16 %v456
  %v1123 = vunpack.c.l.b16 %v457
  %v1124 = vunpack.c.h.b16 %v457
  %v1125 = vunpack.c.l.b16 %v458
  %v1126 = vunpack.c.h.b16 %v458
  %v1127 = vunpack.c.l.b16 %v459
  %v1128 = vunpack.c.h.b16 %v459
  %v1129 = vunpack.c.l.b16 %v460
  %v1130 = vunpack.c.h.b16 %v460
  %v1131 = vunpack.c.l.b16 %v461
  %v1132 = vunpack.c.h.b16 %v461
  %v1133 = vunpack.c.l.b16 %v462
  %v1134 = vunpack.c.h.b16 %v462
  %v1135 = vunpack.c.l.b16 %v463
  %v1136 = vunpack.c.h.b16 %v463
  %v1137 = vunpack.c.l.b16 %v464
  %v1138 = vunpack.c.h.b16 %v464
  %v1139 = vunpack.c.l.b16 %v465
  %v1140 = vunpack.c.h.b16 %v465
  %v1141 = vunpack.c.l.b16 %v466
  %v1142 = vunpack.c.h.b16 %v466
  %v1143 = vunpack.c.l.b16 %v467
  %v1144 = vunpack.c.h.b16 %v467
  %v1145 = vunpack.c.l.b16 %v468
  %v1146 = vunpack.c.h.b16 %v468
  %v1147 = vunpack.c.l.b16 %v469
  %v1148 = vunpack.c.h.b16 %v469
  %v1149 = vunpack.c.l.b16 %v470
  %v1150 = vunpack.c.h.b16 %v470
  %v1151 = vunpack.c.l.b16 %v471
  %v1152 = vunpack.c.h.b16 %v471
  %v1153 = vunpack.c.l.b16 %v472
  %v1154 = vunpack.c.h.b16 %v472
  %v1155 = vunpack.c.l.b16 %v473
  %v1156 = vunpack.c.h.b16 %v473
  %v1157 = vunpack.c.l.b16 %v474
  %v1158 = vunpack.c.h.b16 %v474
  %v1159 = vunpack.c.l.b16 %v475
  %v1160 = vunpack.c.h.b16 %v475
  %v1161 = vunpack.c.l.b16 %v476
  %v1162 = vunpack.c.h.b16 %v476
  %v1163 = vunpack.c.l.b16 %v477
  %v1164 = vunpack.c.h.b16 %v477
  %v1165 = vunpack.c.l.b16 %v478
  %v1166 = vunpack.c.h.b16 %v478
  %v1167 = vunpack.c.l.b16 %v479
  %v1168 = vunpack.c.h.b16 %v479
  %v1169 = vunpack.c.l.b16 %v480
  %v1170 = vunpack.c.h.b16 %v480
  %v1171 = vunpack.c.l.b16 %v481
  %v1172 = vunpack.c.h.b16 %v481
  %v1173 = vunpack.c.l.b16 %v482
  %v1174 = vunpack.c.h.b16 %v482
  %v1175 = vunpack.c.l.b16 %v483
  %v1176 = vunpack.c.h.b16 %v483
  %v1177 = vunpack.c.l.b16 %v484
  %v1178 = vunpack.c.h.b16 %v484
  %v1179 = vunpack.c.l.b16 %v485
  %v1180 = vunpack.c.h.b16 %v485
  %v1181 = vunpack.c.l.b16 %v486
  %v1182 = vunpack.c.h.b16 %v486
  %v1183 = vunpack.c.l.b16 %v487
  %v1184 = vunpack.c.h.b16 %v487
  %v1185 = vunpack.c.l.b16 %v488
  %v1186 = vunpack.c.h.b16 %v488
  %v1187 = vunpack.c.l.b16 %v489
  %v1188 = vunpack.c.h.b16 %v489
  %v1189 = vunpack.c.l.b16 %v490
  %v1190 = vunpack.c.h.b16 %v490
  %v1191 = vunpack.c.l.b16 %v491
  %v1192 = vunpack.c.h.b16 %v491
  %v1193 = vunpack.c.l.b16 %v492
  %v1194 = vunpack.c.h.b16 %v492
  %v1195 = vunpack.c.l.b16 %v493
  %v1196 = vunpack.c.h.b16 %v493
  %v1197 = vunpack.c.l.b16 %v494
  %v1198 = vunpack.c.h.b16 %v494
  %v1199 = vunpack.c.l.b16 %v495
  %v1200 = vunpack.c.h.b16 %v495
  %v1201 = vunpack.c.l.b16 %v496
  %v1202 = vunpack.c.h.b16 %v496
  %v1203 = vunpack.c.l.b16 %v497
  %v1204 = vunpack.c.h.b16 %v497
  %v1205 = vunpack.c.l.b16 %v498
  %v1206 = vunpack.c.h.b16 %v498
  %v1207 = vunpack.c.l.b16 %v499
  %v1208 = vunpack.c.h.b16 %v499
  %v1209 = vunpack.c.l.b16 %v500
  %v1210 = vunpack.c.h.b16 %v500
  %v1211 = vunpack.c.l.b16 %v501
  %v1212 = vunpack.c.h.b16 %v501
  %v1213 = vunpack.c.l.b16 %v502
  %v1214 = vunpack.c.h.b16 %v502
  %v1215 = vunpack.c.l.b16 %v503
  %v1216 = vunpack.c.h.b16 %v503
  %v1217 = vunpack.c.l.b16 %v504
  %v1218 = vunpack.c.h.b16 %v504
  %v1219 = vunpack.c.l.b16 %v505
  %v1220 = vunpack.c.h.b16 %v505
  %v1221 = vunpack.c.l.b16 %v506
  %v1222 = vunpack.c.h.b16 %v506
  %v1223 = vunpack.c.l.b16 %v507
  %v1224 = vunpack.c.h.b16 %v507
  %v1225 = vunpack.c.l.b16 %v508
  %v1226 = vunpack.c.h.b16 %v508
  %v1227 = vunpack.c.l.b16 %v509
  %v1228 = vunpack.c.h.b16 %v509
  %v1229 = vunpack.c.l.b16 %v510
  %v1230 = vunpack.c.h.b16 %v510
  %v1231 = vunpack.c.l.b16 %v511
  %v1232 = vunpack.c.h.b16 %v511
  %v1233 = vunpack.c.l.b16 %v512
  %v1234 = vunpack.c.h.b16 %v512
  %v1235 = vunpack.c.l.b16 %v513
  %v1236 = vunpack.c.h.b16 %v513
  %v1237 = vunpack.c.l.b16 %v514
  %v1238 = vunpack.c.h.b16 %v514
  %v1239 = vunpack.c.l.b16 %v515
  %v1240 = vunpack.c.h.b16 %v515
  %v1241 = vunpack.c.l.b16 %v516
  %v1242 = vunpack.c.h.b16 %v516
  %v1243 = vunpack.c.l.b16 %v517
  %v1244 = vunpack.c.h.b16 %v517
  %v1245 = vunpack.c.l.b16 %v518
  %v1246 = vunpack.c.h.b16 %v518
  %v1247 = vunpack.c.l.b16 %v519
  %v1248 = vunpack.c.h.b16 %v519
  %v1249 = vunpack.c.l.b16 %v520
  %v1250 = vunpack.c.h.b16 %v520
  %v1251 = vunpack.c.l.b16 %v521
  %v1252 = vunpack.c.h.b16 %v521
  %v1253 = vunpack.c.l.b16 %v522
  %v1254 = vunpack.c.h.b16 %v522
  %v1255 = vunpack.c.l.b16 %v523
  %v1256 = vunpack.c.h.b16 %v523
  %v1257 = vunpack.c.l.b16 %v524
  %v1258 = vunpack.c.h.b16 %v524
  %v1259 = vunpack.c.l.b16 %v525
  %v1260 = vunpack.c.h.b16 %v525
  %v1261 = vunpack.c.l.b16 %v526
  %v1262 = vunpack.c.h.b16 %v526
  %v1263 = vunpack.c.l.b16 %v527
  %v1264 = vunpack.c.h.b16 %v527
  %v1265 = vunpack.c.l.b16 %v528
  %v1266 = vunpack.c.h.b16 %v528
  %v1267 = vunpack.c.l.b16 %v529
  %v1268 = vunpack.c.h.b16 %v529
  %v1269 = vunpack.c.l.b16 %v530
  %v1270 = vunpack.c.h.b16 %v530
  %v1271 = vunpack.c.l.b16 %v531
  %v1272 = vunpack.c.h.b16 %v531
  %v1273 = vunpack.c.l.b16 %v532
  %v1274 = vunpack.c.h.b16 %v532
  %v1275 = vunpack.c.l.b16 %v533
  %v1276 = vunpack.c.h.b16 %v533
  %v1277 = vunpack.c.l.b16 %v534
  %v1278 = vunpack.c.h.b16 %v534
  %v1279 = vunpack.c.l.b16 %v535
  %v1280 = vunpack.c.h.b16 %v535
  %v1281 = vunpack.c.l.b16 %v536
  %v1282 = vunpack.c.h.b16 %v536
  %v1283 = vunpack.c.l.b16 %v537
  %v1284 = vunpack.c.h.b16 %v537
  %v1285 = vunpack.c.l.b16 %v538
  %v1286 = vunpack.c.h.b16 %v538
  %v1287 = vunpack.c.l.b16 %v539
  %v1288 = vunpack.c.h.b16 %v539
  %v1289 = vunpack.c.l.b16 %v540
  %v1290 = vunpack.c.h.b16 %v540
  %v1291 = vunpack.c.l.b16 %v541
  %v1292 = vunpack.c.h.b16 %v541
  %v1293 = vunpack.c.l.b16 %v542
  %v1294 = vunpack.c.h.b16 %v542
  %v1295 = vunpack.c.l.b16 %v543
  %v1296 = vunpack.c.h.b16 %v543
  %v1297 = vunpack.c.l.b16 %v544
  %v1298 = vunpack.c.h.b16 %v544
  %v1299 = vunpack.c.l.b16 %v545
  %v1300 = vunpack.c.h.b16 %v545
  %v1301 = vunpack.c.l.b16 %v546
  %v1302 = vunpack.c.h.b16 %v546
  %v1303 = vunpack.c.l.b16 %v547
  %v1304 = vunpack.c.h.b16 %v547
  %v1305 = vunpack.c.l.b16 %v548
  %v1306 = vunpack.c.h.b16 %v548
  %v1307 = vunpack.c.l.b16 %v549
  %v1308 = vunpack.c.h.b16 %v549
  %v1309 = vunpack.c.l.b16 %v550
  %v1310 = vunpack.c.h.b16 %v550
  %v1311 = vunpack.c.l.b16 %v551
  %v1312 = vunpack.c.h.b16 %v551
  %v1313 = vunpack.c.l.b16 %v552
  %v1314 = vunpack.c.h.b16 %v552
  %v1315 = vunpack.c.l.b16 %v553
  %v1316 = vunpack.c.h.b16 %v553
  %v1317 = vunpack.c.l.b16 %v554
  %v1318 = vunpack.c.h.b16 %v554
  %v1319 = vunpack.c.l.b16 %v555
  %v1320 = vunpack.c.h.b16 %v555
  %v1321 = vunpack.c.l.b16 %v556
  %v1322 = vunpack.c.h.b16 %v556
  %v1323 = vunpack.c.l.b16 %v557
  %v1324 = vunpack.c.h.b16 %v557
  %v1325 = vunpack.c.l.b16 %v558
  %v1326 = vunpack.c.h.b16 %v558
  %v1327 = vunpack.c.l.b16 %v559
  %v1328 = vunpack.c.h.b16 %v559
  %v1329 = vunpack.c.l.b16 %v560
  %v1330 = vunpack.c.h.b16 %v560
  %v1331 = vunpack.c.l.b16 %v561
  %v1332 = vunpack.c.h.b16 %v561
  %v1333 = vunpack.c.l.b16 %v562
  %v1334 = vunpack.c.h.b16 %v562
  %v1335 = vunpack.c.l.b16 %v563
  %v1336 = vunpack.c.h.b16 %v563
  %v1337 = vunpack.c.l.b16 %v564
  %v1338 = vunpack.c.h.b16 %v564
  %v1339 = vunpack.c.l.b16 %v565
  %v1340 = vunpack.c.h.b16 %v565
  %v1341 = vunpack.c.l.b16 %v566
  %v1342 = vunpack.c.h.b16 %v566
  %v1343 = vunpack.c.l.b16 %v567
  %v1344 = vunpack.c.h.b16 %v567
  %v1345 = vunpack.c.l.b16 %v568
  %v1346 = vunpack.c.h.b16 %v568
  %v1347 = vunpack.c.l.b16 %v569
  %v1348 = vunpack.c.h.b16 %v569
  %v1349 = vunpack.c.l.b16 %v570
  %v1350 = vunpack.c.h.b16 %v570
  %v1351 = vunpack.c.l.b16 %v571
  %v1352 = vunpack.c.h.b16 %v571
  %v1353 = vunpack.c.l.b16 %v572
  %v1354 = vunpack.c.h.b16 %v572
  %v1355 = vunpack.c.l.b16 %v573
  %v1356 = vunpack.c.h.b16 %v573
  %v1357 = vpack.c.b16 %v911, %v909
  %v1358 = vpack.c.b16 %v912, %v910
  %v1359 = vpack.c.b16 %v915, %v913
  %v1360 = vpack.c.b16 %v916, %v914
  %v1361 = vpack.c.b16 %v919, %v917
  %v1362 = vpack.c.b16 %v920, %v918
  %v1363 = vpack.c.b16 %v923, %v921
  %v1364 = vpack.c.b16 %v924, %v922
  %v1365 = vpack.c.b16 %v927, %v925
  %v1366 = vpack.c.b16 %v928, %v926
  %v1367 = vpack.c.b16 %v931, %v929
  %v1368 = vpack.c.b16 %v932, %v930
  %v1369 = vpack.c.b16 %v935, %v933
  %v1370 = vpack.c.b16 %v936, %v934
  %v1371 = vpack.c.b16 %v939, %v937
  %v1372 = vpack.c.b16 %v940, %v938
  %v1373 = vpack.c.b16 %v943, %v941
  %v1374 = vpack.c.b16 %v944, %v942
  %v1375 = vpack.c.b16 %v947, %v945
  %v1376 = vpack.c.b16 %v948, %v946
  %v1377 = vpack.c.b16 %v951, %v949
  %v1378 = vpack.c.b16 %v952, %v950
  %v1379 = vpack.c.b16 %v955, %v953
  %v1380 = vpack.c.b16 %v956, %v954
  %v1381 = vpack.c.b16 %v959, %v957
  %v1382 = vpack.c.b16 %v960, %v958
  %v1383 = vpack.c.b16 %v963, %v961
  %v1384 = vpack.c.b16 %v964, %v962
  %v1385 = vpack.c.b16 %v967, %v965
  %v1386 = vpack.c.b16 %v968, %v966
  %v1387 = vpack.c.b16 %v971, %v969
  %v1388 = vpack.c.b16 %v972, %v970
  %v1389 = vpack.c.b16 %v975, %v973
  %v1390 = vpack.c.b16 %v976, %v974
  %v1391 = vpack.c.b16 %v979, %v977
  %v1392 = vpack.c.b16 %v980, %v978
  %v1393 = vpack.c.b16 %v983, %v981
  %v1394 = vpack.c.b16 %v984, %v982
  %v1395 = vpack.c.b16 %v987, %v985
  %v1396 = vpack.c.b16 %v988, %v986
  %v1397 = vpack.c.b16 %v991, %v989
  %v1398 = vpack.c.b16 %v992, %v990
  %v1399 = vpack.c.b16 %v995, %v993
  %v1400 = vpack.c.b16 %v996, %v994
  %v1401 = vpack.c.b16 %v999, %v997
  %v1402 = vpack.c.b16 %v1000, %v998
  %v1403 = vpack.c.b16 %v1003, %v1001
  %v1404 = vpack.c.b16 %v1004, %v1002
  %v1405 = vpack.c.b16 %v1007, %v1005
  %v1406 = vpack.c.b16 %v1008, %v1006
  %v1407 = vpack.c.b16 %v1011, %v1009
  %v1408 = vpack.c.b16 %v1012, %v1010
  %v1409 = vpack.c.b16 %v1015, %v1013
  %v1410 = vpack.c.b16 %v1016, %v1014
  %v1411 = vpack.c.b16 %v1019, %v1017
  %v1412 = vpack.c.b16 %v1020, %v1018
  %v1413 = vpack.c.b16 %v1023, %v1021
  %v1414 = vpack.c.b16 %v1024, %v1022
  %v1415 = vpack.c.b16 %v1027, %v1025
  %v1416 = vpack.c.b16 %v1028, %v1026
  %v1417 = vpack.c.b16 %v1031, %v1029
  %v1418 = vpack.c.b16 %v1032, %v1030
  %v1419 = vpack.c.b16 %v1035, %v1033
  %v1420 = vpack.c.b16 %v1036, %v1034
  %v1421 = vpack.c.b16 %v1039, %v1037
  %v1422 = vpack.c.b16 %v1040, %v1038
  %v1423 = vpack.c.b16 %v1043, %v1041
  %v1424 = vpack.c.b16 %v1044, %v1042
  %v1425 = vpack.c.b16 %v1047, %v1045
  %v1426 = vpack.c.b16 %v1048, %v1046
  %v1427 = vpack.c.b16 %v1051, %v1049
  %v1428 = vpack.c.b16 %v1052, %v1050
  %v1429 = vpack.c.b16 %v1055, %v1053
  %v1430 = vpack.c.b16 %v1056, %v1054
  %v1431 = vpack.c.b16 %v1059, %v1057
  %v1432 = vpack.c.b16 %v1060, %v1058
  %v1433 = vpack.c.b16 %v1063, %v1061
  %v1434 = vpack.c.b16 %v1064, %v1062
  %v1435 = vpack.c.b16 %v1067, %v1065
  %v1436 = vpack.c.b16 %v1068, %v1066
  %v1437 = vpack.c.b16 %v1071, %v1069
  %v1438 = vpack.c.b16 %v1072, %v1070
  %v1439 = vpack.c.b16 %v1075, %v1073
  %v1440 = vpack.c.b16 %v1076, %v1074
  %v1441 = vpack.c.b16 %v1079, %v1077
  %v1442 = vpack.c.b16 %v1080, %v1078
  %v1443 = vpack.c.b16 %v1083, %v1081
  %v1444 = vpack.c.b16 %v1084, %v1082
  %v1445 = vpack.c.b16 %v1087, %v1085
  %v1446 = vpack.c.b16 %v1088, %v1086
  %v1447 = vpack.c.b16 %v1091, %v1089
  %v1448 = vpack.c.b16 %v1092, %v1090
  %v1449 = vpack.c.b16 %v1095, %v1093
  %v1450 = vpack.c.b16 %v1096, %v1094
  %v1451 = vpack.c.b16 %v1099, %v1097
  %v1452 = vpack.c.b16 %v1100, %v1098
  %v1453 = vpack.c.b16 %v1103, %v1101
  %v1454 = vpack.c.b16 %v1104, %v1102
  %v1455 = vpack.c.b16 %v1107, %v1105
  %v1456 = vpack.c.b16 %v1108, %v1106
  %v1457 = vpack.c.b16 %v1111, %v1109
  %v1458 = vpack.c.b16 %v1112, %v1110
  %v1459 = vpack.c.b16 %v1115, %v1113
  %v1460 = vpack.c.b16 %v1116, %v1114
  %v1461 = vpack.c.b16 %v1119, %v1117
  %v1462 = vpack.c.b16 %v1120, %v1118
  %v1463 = vpack.c.b16 %v1123, %v1121
  %v1464 = vpack.c.b16 %v1124, %v1122
  %v1465 = vpack.c.b16 %v1127, %v1125
  %v1466 = vpack.c.b16 %v1128, %v1126
  %v1467 = vpack.c.b16 %v1131, %v1129
  %v1468 = vpack.c.b16 %v1132, %v1130
  %v1469 = vpack.c.b16 %v1135, %v1133
  %v1470 = vpack.c.b16 %v1136, %v1134
  %v1471 = vpack.c.b16 %v1139, %v1137
  %v1472 = vpack.c.b16 %v1140, %v1138
  %v1473 = vpack.c.b16 %v1143, %v1141
  %v1474 = vpack.c.b16 %v1144, %v1142
  %v1475 = vpack.c.b16 %v1147, %v1145
  %v1476 = vpack.c.b16 %v1148, %v1146
  %v1477 = vpack.c.b16 %v1151, %v1149
  %v1478 = vpack.c.b16 %v1152, %v1150
  %v1479 = vpack.c.b16 %v1155, %v1153
  %v1480 = vpack.c.b16 %v1156, %v1154
  %v1481 = vpack.c.b16 %v1159, %v1157
  %v1482 = vpack.c.b16 %v1160, %v1158
  %v1483 = vpack.c.b16 %v1163, %v1161
  %v1484 = vpack.c.b16 %v1164, %v1162
  %v1485 = vpack.c.b16 %v1167, %v1165
  %v1486 = vpack.c.b16 %v1168, %v1166
  %v1487 = vpack.c.b16 %v1171, %v1169
  %v1488 = vpack.c.b16 %v1172, %v1170
  %v1489 = vpack.c.b16 %v1175, %v1173
  %v1490 = vpack.c.b16 %v1176, %v1174
  %v1491 = vpack.c.b16 %v1179, %v1177
  %v1492 = vpack.c.b16 %v1180, %v1178
  %v1493 = vpack.c.b16 %v1183, %v1181
  %v1494 = vpack.c.b16 %v1184, %v1182
  %v1495 = vpack.c.b16 %v1187, %v1185
  %v1496 = vpack.c.b16 %v1188, %v1186
  %v1497 = vpack.c.b16 %v1191, %v1189
  %v1498 = vpack.c.b16 %v1192, %v1190
  %v1499 = vpack.c.b16 %v1195, %v1193
  %v1500 = vpack.c.b16 %v1196, %v1194
  %v1501 = vpack.c.b16 %v1199, %v1197
  %v1502 = vpack.c.b16 %v1200, %v1198
  %v1503 = vpack.c.b16 %v1203, %v1201
  %v1504 = vpack.c.b16 %v1204, %v1202
  %v1505 = vpack.c.b16 %v1207, %v1205
  %v1506 = vpack.c.b16 %v1208, %v1206
  %v1507 = vpack.c.b16 %v1211, %v1209
  %v1508 = vpack.c.b16 %v1212, %v1210
  %v1509 = vpack.c.b16 %v1215, %v1213
  %v1510 = vpack.c.b16 %v1216, %v1214
  %v1511 = vpack.c.b16 %v1219, %v1217
  %v1512 = vpack.c.b16 %v1220, %v1218
  %v1513 = vpack.c.b16 %v1223, %v1221
  %v1514 = vpack.c.b16 %v1224, %v1222
  %v1515 = vpack.c.b16 %v1227, %v1225
  %v1516 = vpack.c.b16 %v1228, %v1226
  %v1517 = vpack.c.b16 %v1231, %v1229
  %v1518 = vpack.c.b16 %v1232, %v1230
  %v1519 = vpack.c.b16 %v1235, %v1233
  %v1520 = vpack.c.b16 %v1236, %v1234
  %v1521 = vpack.c.b16 %v1239, %v1237
  %v1522 = vpack.c.b16 %v1240, %v1238
  %v1523 = vpack.c.b16 %v1243, %v1241
  %v1524 = vpack.c.b16 %v1244, %v1242
  %v1525 = vpack.c.b16 %v1247, %v1245
  %v1526 = vpack.c.b16 %v1248, %v1246
  %v1527 = vpack.c.b16 %v1251, %v1249
  %v1528 = vpack.c.b16 %v1252, %v1250
  %v1529 = vpack.c.b16 %v1255, %v1253
  %v1530 = vpack.c.b16 %v1256, %v1254
  %v1531 = vpack.c.b16 %v1259, %v1257
  %v1532 = vpack.c.b16 %v1260, %v1258
  %v1533 = vpack.c.b16 %v1263, %v1261
  %v1534 = vpack.c.b16 %v1264, %v1262
  %v1535 = vpack.c.b16 %v1267, %v1265
  %v1536 = vpack.c.b16 %v1268, %v1266
  %v1537 = vpack.c.b16 %v1271, %v1269
  %v1538 = vpack.c.b16 %v1272, %v1270
  %v1539 = vpack.c.b16 %v1275, %v1273
  %v1540 = vpack.c.b16 %v1276, %v1274
  %v1541 = vpack.c.b16 %v1279, %v1277
  %v1542 = vpack.c.b16 %v1280, %v1278
  %v1543 = vpack.c.b16 %v1283, %v1281
  %v1544 = vpack.c.b16 %v1284, %v1282
  %v1545 = vpack.c.b16 %v1287, %v1285
  %v1546 = vpack.c.b16 %v1288, %v1286
  %v1547 = vpack.c.b16 %v1291, %v1289
  %v1548 = vpack.c.b16 %v1292, %v1290
  %v1549 = vpack.c.b16 %v1295, %v1293
  %v1550 = vpack.c.b16 %v1296, %v1294
  %v1551 = vpack.c.b16 %v1299, %v1297
  %v1552 = vpack.c.b16 %v1300, %v1298
  %v1553 = vpack.c.b16 %v1303, %v1301
  %v1554 = vpack.c.b16 %v1304, %v1302
  %v1555 = vpack.c.b16 %v1307, %v1305
  %v1556 = vpack.c.b16 %v1308, %v1306
  %v1557 = vpack.c.b16 %v1311, %v1309
  %v1558 = vpack.c.b16 %v1312, %v1310
  %v1559 = vpack.c.b16 %v1315, %v1313
  %v1560 = vpack.c.b16 %v1316, %v1314
  %v1561 = vpack.c.b16 %v1319, %v1317
  %v1562 = vpack.c.b16 %v1320, %v1318
  %v1563 = vpack.c.b16 %v1323, %v1321
  %v1564 = vpack.c.b16 %v1324, %v1322
  %v1565 = vpack.c.b16 %v1327, %v1325
  %v1566 = vpack.c.b16 %v1328, %v1326
  %v1567 = vpack.c.b16 %v1331, %v1329
  %v1568 = vpack.c.b16 %v1332, %v1330
  %v1569 = vpack.c.b16 %v1335, %v1333
  %v1570 = vpack.c.b16 %v1336, %v1334
  %v1571 = vpack.c.b16 %v1339, %v1337
  %v1572 = vpack.c.b16 %v1340, %v1338
  %v1573 = vpack.c.b16 %v1343, %v1341
  %v1574 = vpack.c.b16 %v1344, %v1342
  %v1575 = vpack.c.b16 %v1347, %v1345
  %v1576 = vpack.c.b16 %v1348, %v1346
  %v1577 = vpack.c.b16 %v1351, %v1349
  %v1578 = vpack.c.b16 %v1352, %v1350
  %v1579 = vpack.c.b16 %v1355, %v1353
  %v1580 = vpack.c.b16 %v1356, %v1354
  %1805 = vmatprep.subr.bf16.mxu0 %v1358
  %1806 = vmatpush1.bf16.msra.mxu0 %v1357
  %1807 = vmatprep.subr.bf16.mxu0 %v1360
  %1808 = vmatpush1.bf16.msra.mxu0 %v1359
  %1809 = vmatprep.subr.bf16.mxu0 %v1362
  %1810 = vmatpush1.bf16.msra.mxu0 %v1361
  %1811 = vmatprep.subr.bf16.mxu0 %v1364
  %1812 = vmatpush1.bf16.msra.mxu0 %v1363
  %1813 = vmatprep.subr.bf16.mxu0 %v1366
  %1814 = vmatpush1.bf16.msra.mxu0 %v1365
  %1815 = vmatprep.subr.bf16.mxu0 %v1368
  %1816 = vmatpush1.bf16.msra.mxu0 %v1367
  %1817 = vmatprep.subr.bf16.mxu0 %v1370
  %1818 = vmatpush1.bf16.msra.mxu0 %v1369
  %1819 = vmatprep.subr.bf16.mxu0 %v1372
  %1820 = vmatpush1.bf16.msra.mxu0 %v1371
  %1821 = vmatprep.subr.bf16.mxu0 %v1374
  %1822 = vmatpush1.bf16.msra.mxu0 %v1373
  %1823 = vmatprep.subr.bf16.mxu0 %v1376
  %1824 = vmatpush1.bf16.msra.mxu0 %v1375
  %1825 = vmatprep.subr.bf16.mxu0 %v1378
  %1826 = vmatpush1.bf16.msra.mxu0 %v1377
  %1827 = vmatprep.subr.bf16.mxu0 %v1380
  %1828 = vmatpush1.bf16.msra.mxu0 %v1379
  %1829 = vmatprep.subr.bf16.mxu0 %v1382
  %1830 = vmatpush1.bf16.msra.mxu0 %v1381
  %1831 = vmatprep.subr.bf16.mxu0 %v1384
  %1832 = vmatpush1.bf16.msra.mxu0 %v1383
  %1833 = vmatprep.subr.bf16.mxu0 %v1386
  %1834 = vmatpush1.bf16.msra.mxu0 %v1385
  %1835 = vmatprep.subr.bf16.mxu0 %v1388
  %1836 = vmatpush1.bf16.msra.mxu0 %v1387
  %1837 = vmatprep.mubr.bf16.mxu0 %v658
  %1838 = vmatmul.mubr.bf16.gmra.mrb[0].mxu0 %v657
  %v1839 = vpop.f32.mrb[0].mxu0
  %v1840 = vadd.f32 %v579, %v1839
  %v1841 = vpop.f32.mrb[0].mxu0
  %v1842 = vadd.f32 %v583, %v1841
  %v1843 = vpop.f32.mrb[0].mxu0
  %v1844 = vpop.f32.mrb[0].mxu0
  %1845 = vdwg.mxu0
  %1846 = vmatprep.subr.bf16.mxu0 %v1390
  %1847 = vmatpush1.bf16.msra.mxu0 %v1389
  %1848 = vmatprep.subr.bf16.mxu0 %v1392
  %1849 = vmatpush1.bf16.msra.mxu0 %v1391
  %1850 = vmatprep.subr.bf16.mxu0 %v1394
  %1851 = vmatpush1.bf16.msra.mxu0 %v1393
  %1852 = vmatprep.subr.bf16.mxu0 %v1396
  %1853 = vmatpush1.bf16.msra.mxu0 %v1395
  %1854 = vmatprep.subr.bf16.mxu0 %v1398
  %1855 = vmatpush1.bf16.msra.mxu0 %v1397
  %1856 = vmatprep.subr.bf16.mxu0 %v1400
  %1857 = vmatpush1.bf16.msra.mxu0 %v1399
  %1858 = vmatprep.subr.bf16.mxu0 %v1402
  %1859 = vmatpush1.bf16.msra.mxu0 %v1401
  %1860 = vmatprep.subr.bf16.mxu0 %v1404
  %1861 = vmatpush1.bf16.msra.mxu0 %v1403
  %1862 = vmatprep.subr.bf16.mxu0 %v1406
  %1863 = vmatpush1.bf16.msra.mxu0 %v1405
  %1864 = vmatprep.subr.bf16.mxu0 %v1408
  %1865 = vmatpush1.bf16.msra.mxu0 %v1407
  %1866 = vmatprep.subr.bf16.mxu0 %v1410
  %1867 = vmatpush1.bf16.msra.mxu0 %v1409
  %1868 = vmatprep.subr.bf16.mxu0 %v1412
  %1869 = vmatpush1.bf16.msra.mxu0 %v1411
  %1870 = vmatprep.subr.bf16.mxu0 %v1414
  %1871 = vmatpush1.bf16.msra.mxu0 %v1413
  %1872 = vmatprep.subr.bf16.mxu0 %v1416
  %1873 = vmatpush1.bf16.msra.mxu0 %v1415
  %1874 = vmatprep.subr.bf16.mxu0 %v1418
  %1875 = vmatpush1.bf16.msra.mxu0 %v1417
  %1876 = vmatprep.subr.bf16.mxu0 %v1420
  %1877 = vmatpush1.bf16.msra.mxu0 %v1419
  %1878 = vmatprep.mubr.bf16.mxu0 %v660
  %1879 = vmatmul.mubr.bf16.gmra.mrb[0].mxu0 %v659
  %v1880 = vpop.f32.mrb[0].mxu0
  %v1881 = vadd.f32 %v1840, %v1880
  %v1882 = vpop.f32.mrb[0].mxu0
  %v1883 = vadd.f32 %v1842, %v1882
  %v1884 = vpop.f32.mrb[0].mxu0
  %v1885 = vpop.f32.mrb[0].mxu0
  %1886 = vdwg.mxu0
  %1887 = vmatprep.subr.bf16.mxu0 %v1422
  %1888 = vmatpush1.bf16.msra.mxu0 %v1421
  %1889 = vmatprep.subr.bf16.mxu0 %v1424
  %1890 = vmatpush1.bf16.msra.mxu0 %v1423
  %1891 = vmatprep.subr.bf16.mxu0 %v1426
  %1892 = vmatpush1.bf16.msra.mxu0 %v1425
  %1893 = vmatprep.subr.bf16.mxu0 %v1428
  %1894 = vmatpush1.bf16.msra.mxu0 %v1427
  %1895 = vmatprep.subr.bf16.mxu0 %v1430
  %1896 = vmatpush1.bf16.msra.mxu0 %v1429
  %1897 = vmatprep.subr.bf16.mxu0 %v1432
  %1898 = vmatpush1.bf16.msra.mxu0 %v1431
  %1899 = vmatprep.subr.bf16.mxu0 %v1434
  %1900 = vmatpush1.bf16.msra.mxu0 %v1433
  %1901 = vmatprep.subr.bf16.mxu0 %v1436
  %1902 = vmatpush1.bf16.msra.mxu0 %v1435
  %1903 = vmatprep.subr.bf16.mxu0 %v1438
  %1904 = vmatpush1.bf16.msra.mxu0 %v1437
  %1905 = vmatprep.subr.bf16.mxu0 %v1440
  %1906 = vmatpush1.bf16.msra.mxu0 %v1439
  %1907 = vmatprep.subr.bf16.mxu0 %v1442
  %1908 = vmatpush1.bf16.msra.mxu0 %v1441
  %1909 = vmatprep.subr.bf16.mxu0 %v1444
  %1910 = vmatpush1.bf16.msra.mxu0 %v1443
  %1911 = vmatprep.subr.bf16.mxu0 %v1446
  %1912 = vmatpush1.bf16.msra.mxu0 %v1445
  %1913 = vmatprep.subr.bf16.mxu0 %v1448
  %1914 = vmatpush1.bf16.msra.mxu0 %v1447
  %1915 = vmatprep.subr.bf16.mxu0 %v1450
  %1916 = vmatpush1.bf16.msra.mxu0 %v1449
  %1917 = vmatprep.subr.bf16.mxu0 %v1452
  %1918 = vmatpush1.bf16.msra.mxu0 %v1451
  %1919 = vmatprep.mubr.bf16.mxu0 %v662
  %1920 = vmatmul.mubr.bf16.gmra.mrb[0].mxu0 %v661
  %v1921 = vpop.f32.mrb[0].mxu0
  %v1922 = vadd.f32 %v1881, %v1921
  %v1923 = vpop.f32.mrb[0].mxu0
  %v1924 = vadd.f32 %v1883, %v1923
  %v1925 = vpop.f32.mrb[0].mxu0
  %v1926 = vpop.f32.mrb[0].mxu0
  %1927 = vdwg.mxu0
  %1928 = vmatprep.subr.bf16.mxu0 %v1454
  %1929 = vmatpush1.bf16.msra.mxu0 %v1453
  %1930 = vmatprep.subr.bf16.mxu0 %v1456
  %1931 = vmatpush1.bf16.msra.mxu0 %v1455
  %1932 = vmatprep.subr.bf16.mxu0 %v1458
  %1933 = vmatpush1.bf16.msra.mxu0 %v1457
  %1934 = vmatprep.subr.bf16.mxu0 %v1460
  %1935 = vmatpush1.bf16.msra.mxu0 %v1459
  %1936 = vmatprep.subr.bf16.mxu0 %v1462
  %1937 = vmatpush1.bf16.msra.mxu0 %v1461
  %1938 = vmatprep.subr.bf16.mxu0 %v1464
  %1939 = vmatpush1.bf16.msra.mxu0 %v1463
  %1940 = vmatprep.subr.bf16.mxu0 %v1466
  %1941 = vmatpush1.bf16.msra.mxu0 %v1465
  %1942 = vmatprep.subr.bf16.mxu0 %v1468
  %1943 = vmatpush1.bf16.msra.mxu0 %v1467
  %1944 = vmatprep.subr.bf16.mxu0 %v1470
  %1945 = vmatpush1.bf16.msra.mxu0 %v1469
  %1946 = vmatprep.subr.bf16.mxu0 %v1472
  %1947 = vmatpush1.bf16.msra.mxu0 %v1471
  %1948 = vmatprep.subr.bf16.mxu0 %v1474
  %1949 = vmatpush1.bf16.msra.mxu0 %v1473
  %1950 = vmatprep.subr.bf16.mxu0 %v1476
  %1951 = vmatpush1.bf16.msra.mxu0 %v1475
  %1952 = vmatprep.subr.bf16.mxu0 %v1478
  %1953 = vmatpush1.bf16.msra.mxu0 %v1477
  %1954 = vmatprep.subr.bf16.mxu0 %v1480
  %1955 = vmatpush1.bf16.msra.mxu0 %v1479
  %1956 = vmatprep.subr.bf16.mxu0 %v1482
  %1957 = vmatpush1.bf16.msra.mxu0 %v1481
  %1958 = vmatprep.subr.bf16.mxu0 %v1484
  %1959 = vmatpush1.bf16.msra.mxu0 %v1483
  %1960 = vmatprep.mubr.bf16.mxu0 %v664
  %1961 = vmatmul.mubr.bf16.gmra.mrb[0].mxu0 %v663
  %v1962 = vpop.f32.mrb[0].mxu0
  %v1963 = vadd.f32 %v1922, %v1962
  %v1964 = vpop.f32.mrb[0].mxu0
  %v1965 = vadd.f32 %v1924, %v1964
  %v1966 = vpop.f32.mrb[0].mxu0
  %v1967 = vpop.f32.mrb[0].mxu0
  %1968 = vdwg.mxu0
  %1969 = vmatprep.subr.bf16.mxu0 %v1486
  %1970 = vmatpush1.bf16.msra.mxu0 %v1485
  %1971 = vmatprep.subr.bf16.mxu0 %v1488
  %1972 = vmatpush1.bf16.msra.mxu0 %v1487
  %1973 = vmatprep.subr.bf16.mxu0 %v1490
  %1974 = vmatpush1.bf16.msra.mxu0 %v1489
  %1975 = vmatprep.subr.bf16.mxu0 %v1492
  %1976 = vmatpush1.bf16.msra.mxu0 %v1491
  %1977 = vmatprep.subr.bf16.mxu0 %v1494
  %1978 = vmatpush1.bf16.msra.mxu0 %v1493
  %1979 = vmatprep.subr.bf16.mxu0 %v1496
  %1980 = vmatpush1.bf16.msra.mxu0 %v1495
  %1981 = vmatprep.subr.bf16.mxu0 %v1498
  %1982 = vmatpush1.bf16.msra.mxu0 %v1497
  %1983 = vmatprep.subr.bf16.mxu0 %v1500
  %1984 = vmatpush1.bf16.msra.mxu0 %v1499
  %1985 = vmatprep.subr.bf16.mxu0 %v1502
  %1986 = vmatpush1.bf16.msra.mxu0 %v1501
  %1987 = vmatprep.subr.bf16.mxu0 %v1504
  %1988 = vmatpush1.bf16.msra.mxu0 %v1503
  %1989 = vmatprep.subr.bf16.mxu0 %v1506
  %1990 = vmatpush1.bf16.msra.mxu0 %v1505
  %1991 = vmatprep.subr.bf16.mxu0 %v1508
  %1992 = vmatpush1.bf16.msra.mxu0 %v1507
  %1993 = vmatprep.subr.bf16.mxu0 %v1510
  %1994 = vmatpush1.bf16.msra.mxu0 %v1509
  %1995 = vmatprep.subr.bf16.mxu0 %v1512
  %1996 = vmatpush1.bf16.msra.mxu0 %v1511
  %1997 = vmatprep.subr.bf16.mxu0 %v1514
  %1998 = vmatpush1.bf16.msra.mxu0 %v1513
  %1999 = vmatprep.subr.bf16.mxu0 %v1516
  %2000 = vmatpush1.bf16.msra.mxu0 %v1515
  %2001 = vmatprep.mubr.bf16.mxu0 %v666
  %2002 = vmatmul.mubr.bf16.gmra.mrb[0].mxu0 %v665
  %v2003 = vpop.f32.mrb[0].mxu0
  %v2004 = vadd.f32 %v1963, %v2003
  %v2005 = vpop.f32.mrb[0].mxu0
  %v2006 = vadd.f32 %v1965, %v2005
  %v2007 = vpop.f32.mrb[0].mxu0
  %v2008 = vpop.f32.mrb[0].mxu0
  %2009 = vdwg.mxu0
  %2010 = vmatprep.subr.bf16.mxu0 %v1518
  %2011 = vmatpush1.bf16.msra.mxu0 %v1517
  %2012 = vmatprep.subr.bf16.mxu0 %v1520
  %2013 = vmatpush1.bf16.msra.mxu0 %v1519
  %2014 = vmatprep.subr.bf16.mxu0 %v1522
  %2015 = vmatpush1.bf16.msra.mxu0 %v1521
  %2016 = vmatprep.subr.bf16.mxu0 %v1524
  %2017 = vmatpush1.bf16.msra.mxu0 %v1523
  %2018 = vmatprep.subr.bf16.mxu0 %v1526
  %2019 = vmatpush1.bf16.msra.mxu0 %v1525
  %2020 = vmatprep.subr.bf16.mxu0 %v1528
  %2021 = vmatpush1.bf16.msra.mxu0 %v1527
  %2022 = vmatprep.subr.bf16.mxu0 %v1530
  %2023 = vmatpush1.bf16.msra.mxu0 %v1529
  %2024 = vmatprep.subr.bf16.mxu0 %v1532
  %2025 = vmatpush1.bf16.msra.mxu0 %v1531
  %2026 = vmatprep.subr.bf16.mxu0 %v1534
  %2027 = vmatpush1.bf16.msra.mxu0 %v1533
  %2028 = vmatprep.subr.bf16.mxu0 %v1536
  %2029 = vmatpush1.bf16.msra.mxu0 %v1535
  %2030 = vmatprep.subr.bf16.mxu0 %v1538
  %2031 = vmatpush1.bf16.msra.mxu0 %v1537
  %2032 = vmatprep.subr.bf16.mxu0 %v1540
  %2033 = vmatpush1.bf16.msra.mxu0 %v1539
  %2034 = vmatprep.subr.bf16.mxu0 %v1542
  %2035 = vmatpush1.bf16.msra.mxu0 %v1541
  %2036 = vmatprep.subr.bf16.mxu0 %v1544
  %2037 = vmatpush1.bf16.msra.mxu0 %v1543
  %2038 = vmatprep.subr.bf16.mxu0 %v1546
  %2039 = vmatpush1.bf16.msra.mxu0 %v1545
  %2040 = vmatprep.subr.bf16.mxu0 %v1548
  %2041 = vmatpush1.bf16.msra.mxu0 %v1547
  %2042 = vmatprep.mubr.bf16.mxu0 %v668
  %2043 = vmatmul.mubr.bf16.gmra.mrb[0].mxu0 %v667
  %v2044 = vpop.f32.mrb[0].mxu0
  %v2045 = vadd.f32 %v2004, %v2044
  %v2046 = vpop.f32.mrb[0].mxu0
  %v2047 = vadd.f32 %v2006, %v2046
  %v2048 = vpop.f32.mrb[0].mxu0
  %v2049 = vpop.f32.mrb[0].mxu0
  %2050 = vdwg.mxu0
  %2051 = vmatprep.subr.bf16.mxu0 %v1550
  %2052 = vmatpush1.bf16.msra.mxu0 %v1549
  %2053 = vmatprep.subr.bf16.mxu0 %v1552
  %2054 = vmatpush1.bf16.msra.mxu0 %v1551
  %2055 = vmatprep.subr.bf16.mxu0 %v1554
  %2056 = vmatpush1.bf16.msra.mxu0 %v1553
  %2057 = vmatprep.subr.bf16.mxu0 %v1556
  %2058 = vmatpush1.bf16.msra.mxu0 %v1555
  %2059 = vmatprep.subr.bf16.mxu0 %v1558
  %2060 = vmatpush1.bf16.msra.mxu0 %v1557
  %2061 = vmatprep.subr.bf16.mxu0 %v1560
  %2062 = vmatpush1.bf16.msra.mxu0 %v1559
  %2063 = vmatprep.subr.bf16.mxu0 %v1562
  %2064 = vmatpush1.bf16.msra.mxu0 %v1561
  %2065 = vmatprep.subr.bf16.mxu0 %v1564
  %2066 = vmatpush1.bf16.msra.mxu0 %v1563
  %2067 = vmatprep.subr.bf16.mxu0 %v1566
  %2068 = vmatpush1.bf16.msra.mxu0 %v1565
  %2069 = vmatprep.subr.bf16.mxu0 %v1568
  %2070 = vmatpush1.bf16.msra.mxu0 %v1567
  %2071 = vmatprep.subr.bf16.mxu0 %v1570
  %2072 = vmatpush1.bf16.msra.mxu0 %v1569
  %2073 = vmatprep.subr.bf16.mxu0 %v1572
  %2074 = vmatpush1.bf16.msra.mxu0 %v1571
  %2075 = vmatprep.subr.bf16.mxu0 %v1574
  %2076 = vmatpush1.bf16.msra.mxu0 %v1573
  %2077 = vmatprep.subr.bf16.mxu0 %v1576
  %2078 = vmatpush1.bf16.msra.mxu0 %v1575
  %2079 = vmatprep.subr.bf16.mxu0 %v1578
  %2080 = vmatpush1.bf16.msra.mxu0 %v1577
  %2081 = vmatprep.subr.bf16.mxu0 %v1580
  %2082 = vmatpush1.bf16.msra.mxu0 %v1579
  %2083 = vmatprep.mubr.bf16.mxu0 %v670
  %2084 = vmatmul.mubr.bf16.gmra.mrb[0].mxu0 %v669
  %v2085 = vpop.f32.mrb[0].mxu0
  %v2086 = vadd.f32 %v2045, %v2085
  %v2087 = vpop.f32.mrb[0].mxu0
  %v2088 = vadd.f32 %v2047, %v2087
  %v2089 = vpop.f32.mrb[0].mxu0
  %v2090 = vpop.f32.mrb[0].mxu0
  %2091 = vdwg.mxu0
  %v2094 = vcombine.low %v2086, %v2088
  %v2096 = vunpack.c.l.s4 1983009808
  %v2097 = vunpack.c.0.s8 %v2096
  %v2098 = vlaneseq
  %v2099 = vshrl.u32 %v2098, 7
  %v2100 = vsub.s32 %v2097, %v2099
  %v2101 = vrot.slane %v2094, %v2100
  %2103 = vst [vmem:[%s3] sm:$0xf] %v2101
  // Predicated region
  $region14: #{ldrnet_forward.1} parent=0 // pred_check
    _
  $region15: #{ldrnet_forward.1} parent=0 // pred_check_branch
    %2105 = sbr.rel (0) target = $region17
  $region16: #{ldrnet_forward.1} parent=0 // pred_region
    _
  $region17: #{ldrnet_forward.1} parent=0 // pred_fallthru
    _
  // Predicated region
  $region18: #{ldrnet_forward.1} parent=0 // pred_check
    _
  $region19: #{ldrnet_forward.1} parent=0 // pred_check_branch
    %2107 = sbr.rel (0) target = $region21
  $region20: #{ldrnet_forward.1} parent=0 // pred_region
    _
  $region21: #{ldrnet_forward.1} parent=0 // pred_fallthru
    _

</llo_original>
